<compile_context>
chip_gen: v5e
topology: v5e:2x2
jax: 0.10.0
libtpu: 0.0.40
codegen_flags: <defaults>
</compile_context>

<pallas_src>
import functools

import jax
import jax.numpy as jnp
import numpy as np
from jax import lax
from jax.experimental import pallas as pl
from jax.experimental.pallas import tpu as pltpu

# Rows of the packed per-channel parameter slab (shape (8, D), f32).
_ROW_B_A = 0   # pointwise-1 bias, GLU "value" half   (LN beta folded in)
_ROW_B_G = 1   # pointwise-1 bias, GLU "gate"  half   (LN beta folded in)
_ROW_DW0 = 2   # depthwise tap k=0  (t-1)             (BN scale folded in)
_ROW_DW1 = 3   # depthwise tap k=1  (t)
_ROW_DW2 = 4   # depthwise tap k=2  (t+1)
_ROW_DWB = 5   # depthwise bias                       (BN mean/beta folded in)
_ROW_B2  = 6   # pointwise-2 bias
# row 7 is padding

_HALO_ROWS = 8                    # 2 real halo rows padded to a sublane block
_TILE_T_CAP = 512                 # amortizes per-grid-step overhead
_VMEM_BUDGET = 48 * 2 ** 20       # headroom inside v7x's 64 MiB physical VMEM


def _sigmoid(z):
    # One EUP op (tanh) instead of exp + reciprocal.
    return 0.5 * (jnp.tanh(0.5 * z) + 1.0)


def _conv_module_kernel(
    x_ref,      # (1, TILE_T, D) bf16  raw input rows of this tile
    halo_ref,   # (1, 1, 8, D)   bf16  rows [t_start-1, t_end, 0...0]
    wa_ref,     # (D, D) bf16          pointwise-1 "value" weights (LN folded)
    wg_ref,     # (D, D) bf16          pointwise-1 "gate"  weights (LN folded)
    w2_ref,     # (D, D) bf16          pointwise-2 weights
    vec_ref,    # (8, D) f32           packed per-channel vectors (see _ROW_*)
    o_ref,      # (1, TILE_T, D)       output rows of this tile
    *,
    ln_eps: float,
    seq_len: int,
    roll_mode,
):
    ti = pl.program_id(1)
    tile_t = x_ref.shape[1]

    vec = vec_ref[...]
    b_a   = vec[_ROW_B_A:_ROW_B_A + 1, :]
    b_g   = vec[_ROW_B_G:_ROW_B_G + 1, :]
    dw_w0 = vec[_ROW_DW0:_ROW_DW0 + 1, :]
    dw_w1 = vec[_ROW_DW1:_ROW_DW1 + 1, :]
    dw_w2 = vec[_ROW_DW2:_ROW_DW2 + 1, :]
    dw_b  = vec[_ROW_DWB:_ROW_DWB + 1, :]
    b2    = vec[_ROW_B2:_ROW_B2 + 1, :]

    # LayerNorm (affine folded into W/b) -> pointwise conv #1 -> GLU, computed
    # in ONE pass over [tile rows ; 8-row padded halo] so the halo rows don't
    # pay their own tiny MXU matmuls.  LN statistics in f32.
    xin = jnp.concatenate([x_ref[0], halo_ref[0, 0]], axis=0).astype(jnp.float32)
    m = jnp.mean(xin, axis=-1, keepdims=True)
    c = xin - m
    var = jnp.mean(c * c, axis=-1, keepdims=True)
    vn = (c * lax.rsqrt(var + ln_eps)).astype(jnp.bfloat16)
    a = jnp.dot(vn, wa_ref[...], preferred_element_type=jnp.float32) + b_a
    g = jnp.dot(vn, wg_ref[...], preferred_element_type=jnp.float32) + b_g
    glu_all = a * _sigmoid(g)                       # (tile_t + 8, D) f32

    glu_t    = glu_all[:tile_t, :]
    glu_prev = glu_all[tile_t:tile_t + 1, :]        # from raw row t_start - 1
    glu_next = glu_all[tile_t + 1:tile_t + 2, :]    # from raw row t_end

    row = lax.broadcasted_iota(jnp.int32, (tile_t, 1), 0)

    # Rows past the true sequence end (T padded up to a tile multiple) must
    # behave like the conv1d zero padding: zero their GLU activations.
    if seq_len % tile_t != 0:
        glu_t = jnp.where(ti * tile_t + row < seq_len, glu_t, 0.0)

    # Zero the halo rows at the true sequence ends (the conv zero padding acts
    # on the GLU output, so GLU(LN(0)) would be wrong there).
    prev_ok = (ti > 0).astype(jnp.float32)
    next_ok = ((ti + 1) * tile_t < seq_len).astype(jnp.float32)
    glu_prev = glu_prev * prev_ok
    glu_next = glu_next * next_ok

    # Depthwise conv (kernel_size=3, padding=1, groups=D) with BN folded in:
    #   dw[t] = w0*glu[t-1] + w1*glu[t] + w2*glu[t+1] + b
    if roll_mode is None:
        # Known-good (but copy-heavy) fallback path.
        x_prev = jnp.concatenate([glu_prev, glu_t[:tile_t - 1, :]], axis=0)
        x_next = jnp.concatenate([glu_t[1:, :], glu_next], axis=0)
    else:
        s_prev = 1 if roll_mode == "fwd" else tile_t - 1
        s_next = tile_t - 1 if roll_mode == "fwd" else 1
        x_prev = jnp.where(row == 0, glu_prev,
                           pltpu.roll(glu_t, shift=s_prev, axis=0))
        x_next = jnp.where(row == tile_t - 1, glu_next,
                           pltpu.roll(glu_t, shift=s_next, axis=0))

    dw = x_prev * dw_w0 + glu_t * dw_w1 + x_next * dw_w2 + dw_b

    # SiLU (swish).
    s = dw * _sigmoid(dw)

    # Pointwise conv #2.
    out = jnp.dot(s.astype(jnp.bfloat16), w2_ref[...],
                  preferred_element_type=jnp.float32) + b2

    # TODO(synk): Dropout is identity in eval mode; training-mode dropout mask
    #             (pltpu.prng_*) intentionally not applied here.
    o_ref[0] = out.astype(o_ref.dtype)


@functools.lru_cache(maxsize=None)
def _detect_roll_mode():
    """Probe pltpu.roll's sublane (axis=0) rotation support and direction.

    Returns "fwd" if it matches jnp.roll (result[i] = x[i - shift]), "rev" if
    it rotates the other way, or None if unsupported (concat fallback).
    """
    n, d = 32, 128

    def k(x_ref, o_ref):
        o_ref[...] = pltpu.roll(x_ref[...], shift=1, axis=0)

    x = np.arange(n * d, dtype=np.float32).reshape(n, d)
    try:
        y = np.asarray(pl.pallas_call(
            k, out_shape=jax.ShapeDtypeStruct((n, d), jnp.float32))(
                jnp.asarray(x)))
    except Exception:
        return None
    if np.array_equal(y, np.roll(x, 1, axis=0)):
        return "fwd"
    if np.array_equal(y, np.roll(x, -1, axis=0)):
        return "rev"
    return None


def _prepare_fused_params(params, *, bn_eps):
    """Fold LN affine into W1/b1 and eval-mode BN into the depthwise conv."""
    D = params["w2_t"].shape[0]
    ln_g = params["ln_g"][0]
    ln_b = params["ln_b"][0]
    w1_t = params["w1_t"]                        # (D, 2D)
    b1 = params["b1"][0]                         # (2D,)

    w1_f = ln_g[:, None] * w1_t                  # gamma folded into W1
    b1_f = b1 + ln_b @ w1_t                      # beta folded into b1
    w_a = w1_f[:, :D]
    w_g = w1_f[:, D:]

    bn_scale = params["bn_g"][0] * lax.rsqrt(params["bn_v"][0] + bn_eps)
    dw_w = params["dw_w"] * bn_scale[None, :]    # (3, D)
    dw_b = (params["dw_b"][0] - params["bn_m"][0]) * bn_scale + params["bn_b"][0]

    vec = jnp.zeros((8, D), jnp.float32)
    vec = vec.at[_ROW_B_A].set(b1_f[:D])
    vec = vec.at[_ROW_B_G].set(b1_f[D:])
    vec = vec.at[_ROW_DW0:_ROW_DW2 + 1].set(dw_w)
    vec = vec.at[_ROW_DWB].set(dw_b)
    vec = vec.at[_ROW_B2].set(params["b2"][0])

    return (w_a.astype(jnp.bfloat16),
            w_g.astype(jnp.bfloat16),
            params["w2_t"].astype(jnp.bfloat16),
            vec)


def _round_up(n, m):
    return (n + m - 1) // m * m


def _vmem_footprint_bytes(tile_t, dim, *, single_buffer_weights=True,
                          in_itemsize=2, out_itemsize=2):
    """Rough VMEM footprint used to pick tile_t and vmem_limit_bytes."""
    w_copies = 1 if single_buffer_weights else 2
    weights = w_copies * (3 * dim * dim * 2 + 8 * dim * 4)
    x_tiles = 2 * tile_t * dim * in_itemsize             # double-buffered in
    halo = 2 * _HALO_ROWS * dim * in_itemsize
    o_tiles = 2 * tile_t * dim * out_itemsize             # double-buffered out
    temps = 6 * (tile_t + _HALO_ROWS) * dim * 4            # live f32 temps
    return weights + x_tiles + halo + o_tiles + temps


def _pick_tile_t(batch, seq_len, dim, *, cap=_TILE_T_CAP, budget=_VMEM_BUDGET):
    t_pad = _round_up(max(seq_len, 8), 8)
    tile = _round_up(min(cap, t_pad), 8)
    while tile > 8 and _vmem_footprint_bytes(tile, dim) > budget:
        tile = _round_up(max(8, tile // 2), 8)
    if batch == 1:
        # Keep >= 2 parallel grid steps so both v7x TensorCores get work.
        while tile > 8 and -(-t_pad // tile) < 2:
            tile = _round_up(max(8, tile // 2), 8)
    return tile


def conv_module_forward(x, params, *, ln_eps=1e-5, bn_eps=1e-5, tile_t=None,
                        out_dtype=jnp.bfloat16):
    """x: (B, T, D) -> (B, T, D) eval-mode forward of ConvolutionModule.

    Activations stream through HBM in bf16 (pass out_dtype=jnp.float32 for a
    full-precision output); all matmuls accumulate in f32 on the MXU.
    """
    B, T, D = x.shape
    if tile_t is None:
        tile_t = _pick_tile_t(B, T, D)
    tile_t = min(tile_t, _round_up(T, 8))
    if tile_t % 8 != 0:
        raise ValueError("tile_t must be a multiple of 8")
    t_pad = _round_up(T, tile_t)
    n_t = t_pad // tile_t

    w_a, w_g, w2, vec = _prepare_fused_params(params, bn_eps=bn_eps)

    xin = x.astype(jnp.bfloat16)
    if t_pad != T:
        xin = jnp.pad(xin, ((0, 0), (0, t_pad - T), (0, 0)))

    # Per-tile halo rows of raw x, padded to a full 8-row sublane block:
    # row 0 = x[t_start - 1], row 1 = x[t_end], rows 2..7 zero.  The boundary
    # rows are also zero-gated inside the kernel at the true sequence ends.
    zeros = jnp.zeros((B, 1, D), xin.dtype)
    first_rows = xin[:, ::tile_t, :]                      # (B, n_t, D)
    last_rows = xin[:, tile_t - 1::tile_t, :]             # (B, n_t, D)
    prev_rows = jnp.concatenate([zeros, last_rows[:, :-1]], axis=1)
    next_rows = jnp.concatenate([first_rows[:, 1:], zeros], axis=1)
    halo = jnp.concatenate(
        [prev_rows[:, :, None, :], next_rows[:, :, None, :],
         jnp.zeros((B, n_t, _HALO_ROWS - 2, D), xin.dtype)],
        axis=2)                                            # (B, n_t, 8, D)

    kernel = functools.partial(_conv_module_kernel, ln_eps=ln_eps, seq_len=T,
                               roll_mode=_detect_roll_mode())

    out_itemsize = np.dtype(out_dtype).itemsize
    footprint = _vmem_footprint_bytes(tile_t, D, out_itemsize=out_itemsize)
    vmem_limit = int(min(64 * 2 ** 20, max(32 * 2 ** 20, footprint * 5 // 4)))

    def run(single_buffer_weights):
        const_kwargs = {}
        if single_buffer_weights:
            # Grid-invariant operands: double buffering buys nothing; halving
            # their VMEM frees headroom for larger T tiles.
            const_kwargs = dict(pipeline_mode=pl.Buffered(1))
        grid_spec = pltpu.PrefetchScalarGridSpec(
            num_scalar_prefetch=0,
            grid=(B, n_t),
            in_specs=[
                pl.BlockSpec((1, tile_t, D), lambda b, t: (b, t, 0)),
                pl.BlockSpec((1, 1, _HALO_ROWS, D), lambda b, t: (b, t, 0, 0)),
                pl.BlockSpec((D, D), lambda b, t: (0, 0), **const_kwargs),
                pl.BlockSpec((D, D), lambda b, t: (0, 0), **const_kwargs),
                pl.BlockSpec((D, D), lambda b, t: (0, 0), **const_kwargs),
                pl.BlockSpec((8, D), lambda b, t: (0, 0), **const_kwargs),
            ],
            out_specs=pl.BlockSpec((1, tile_t, D), lambda b, t: (b, t, 0)),
        )
        return pl.pallas_call(
            kernel,
            out_shape=jax.ShapeDtypeStruct((B, t_pad, D), out_dtype),
            grid_spec=grid_spec,
            compiler_params=pltpu.CompilerParams(
                dimension_semantics=("parallel", "parallel"),
                vmem_limit_bytes=vmem_limit),
        )(xin, halo, w_a, w_g, w2, vec)

    try:
        out = run(True)
    except Exception:
        # Fallback for jax versions without pl.Buffered(1) single-buffering.
        out = run(False)

    if t_pad != T:
        out = out[:, :T, :]
    return out


def _reference_forward(x, params, *, ln_eps=1e-5, bn_eps=1e-5):
    """Pure-JAX f32 reference matching PyTorch eval-mode semantics, (B,T,D)."""
    D = x.shape[-1]
    mean = jnp.mean(x, axis=-1, keepdims=True)
    var = jnp.mean((x - mean) ** 2, axis=-1, keepdims=True)
    xn = (x - mean) / jnp.sqrt(var + ln_eps)
    xn = xn * params["ln_g"][0] + params["ln_b"][0]

    y = jnp.einsum("btd,de->bte", xn, params["w1_t"]) + params["b1"][0]
    glu = y[..., :D] * jax.nn.sigmoid(y[..., D:])

    pad = jnp.pad(glu, ((0, 0), (1, 1), (0, 0)))
    dw = (pad[:, :-2, :] * params["dw_w"][0]
          + pad[:, 1:-1, :] * params["dw_w"][1]
          + pad[:, 2:, :] * params["dw_w"][2]
          + params["dw_b"][0])

    bn = (dw - params["bn_m"][0]) / jnp.sqrt(params["bn_v"][0] + bn_eps)
    bn = bn * params["bn_g"][0] + params["bn_b"][0]
    s = bn * jax.nn.sigmoid(bn)
    return jnp.einsum("btd,de->bte", s, params["w2_t"]) + params["b2"][0]


def make_params(key, dim):
    """Deterministic synthetic parameters (shapes match the PyTorch module)."""
    keys = jax.random.split(key, 12)
    scale = 0.1
    return {
        "ln_g": 1.0 + scale * jax.random.normal(keys[0], (1, dim), jnp.float32),
        "ln_b": scale * jax.random.normal(keys[1], (1, dim), jnp.float32),
        # Conv1d(dim, 2*dim, 1) weight is (2D, D, 1); stored transposed (D, 2D).
        "w1_t": scale * jax.random.normal(keys[2], (dim, 2 * dim), jnp.float32),
        "b1":   scale * jax.random.normal(keys[3], (1, 2 * dim), jnp.float32),
        # Depthwise Conv1d(dim, dim, 3, groups=dim) weight (D,1,3); stored (3,D).
        "dw_w": scale * jax.random.normal(keys[4], (3, dim), jnp.float32),
        "dw_b": scale * jax.random.normal(keys[5], (1, dim), jnp.float32),
        "bn_g": 1.0 + scale * jax.random.normal(keys[6], (1, dim), jnp.float32),
        "bn_b": scale * jax.random.normal(keys[7], (1, dim), jnp.float32),
        "bn_m": scale * jax.random.normal(keys[8], (1, dim), jnp.float32),
        "bn_v": jax.random.uniform(keys[9], (1, dim), jnp.float32, 0.5, 1.5),
        # Conv1d(dim, dim, 1) weight is (D, D, 1); stored transposed as (D, D).
        "w2_t": scale * jax.random.normal(keys[10], (dim, dim), jnp.float32),
        "b2":   scale * jax.random.normal(keys[11], (1, dim), jnp.float32),
    }


if __name__ == "__main__":
    # D lane-aligned (multiple of 128); two T-tiles so the halo path is hit.
    B, T, D = 2, 64, 128
    key = jax.random.PRNGKey(0)
    kx, kp = jax.random.split(key)
    x = jax.random.normal(kx, (B, T, D), jnp.float32)
    params = make_params(kp, D)

    out = conv_module_forward(x, params, tile_t=32)
    out = jax.block_until_ready(out)

    ref = _reference_forward(x, params)
    # bf16 activation I/O + bf16 matmul operands (f32 accumulation).
    np.testing.assert_allclose(np.asarray(out.astype(jnp.float32)),
                               np.asarray(ref), rtol=3e-2, atol=3e-2)

    # Ragged sequence length: exercises pad-to-tile + in-kernel tail masking.
    T2 = 50
    x2 = x[:, :T2, :]
    out2 = jax.block_until_ready(conv_module_forward(x2, params, tile_t=32))
    ref2 = _reference_forward(x2, params)
    np.testing.assert_allclose(np.asarray(out2.astype(jnp.float32)),
                               np.asarray(ref2), rtol=3e-2, atol=3e-2)

    print("KERNEL_OK")
</pallas_src>

<mosaic_0001>
module attributes {stable_mosaic.version = 11 : i64} {
  func.func @k(%arg0: memref<32x128xf32, #tpu.memory_space<vmem>>, %arg1: memref<32x128xf32, #tpu.memory_space<vmem>>) attributes {dimension_semantics = [], scalar_prefetch = 0 : i64, scratch_operands = 0 : i64, tpu.core_type = #tpu.core_type<tc>} {
    %c0 = arith.constant 0 : index
    %c0_0 = arith.constant 0 : index
    %0 = vector.load %arg0[%c0, %c0_0] : memref<32x128xf32, #tpu.memory_space<vmem>>, vector<32x128xf32>
    %c1_i32 = arith.constant 1 : i32
    %1 = tpu.dynamic_rotate %0 by %c1_i32 dim 0 : vector<32x128xf32>, i32 -> vector<32x128xf32>
    %c0_1 = arith.constant 0 : index
    %c0_2 = arith.constant 0 : index
    %2 = vector.load %arg1[%c0_1, %c0_2] : memref<32x128xf32, #tpu.memory_space<vmem>>, vector<32x128xf32>
    tpu.vector_store %arg1[%c0_1, %c0_2], %1 {strides = array<i32>} : memref<32x128xf32, #tpu.memory_space<vmem>>, vector<32x128xf32>,
    return
  }
}

module attributes {stable_mosaic.version = 11 : i64} {
  func.func @_conv_module_kernel(%arg0: i32, %arg1: i32, %arg2: memref<1x32x128xbf16, #tpu.memory_space<vmem>>, %arg3: memref<1x1x8x128xbf16, #tpu.memory_space<vmem>>, %arg4: memref<128x128xbf16, #tpu.memory_space<vmem>>, %arg5: memref<128x128xbf16, #tpu.memory_space<vmem>>, %arg6: memref<128x128xbf16, #tpu.memory_space<vmem>>, %arg7: memref<8x128xf32, #tpu.memory_space<vmem>>, %arg8: memref<1x32x128xbf16, #tpu.memory_space<vmem>>) attributes {dimension_semantics = [#tpu.dimension_semantics<parallel>, #tpu.dimension_semantics<parallel>], iteration_bounds = array<i64: 2, 2>, scalar_prefetch = 0 : i64, scratch_operands = 0 : i64, tpu.core_type = #tpu.core_type<tc>, window_params = [{transform_indices = @transform_0, window_bounds = array<i64: 1, 32, 128>}, {transform_indices = @transform_1, window_bounds = array<i64: 1, 1, 8, 128>}, {pipeline_mode = #tpu.pipeline_mode<synchronous>, transform_indices = @transform_2, window_bounds = array<i64: 128, 128>}, {pipeline_mode = #tpu.pipeline_mode<synchronous>, transform_indices = @transform_3, window_bounds = array<i64: 128, 128>}, {pipeline_mode = #tpu.pipeline_mode<synchronous>, transform_indices = @transform_4, window_bounds = array<i64: 128, 128>}, {pipeline_mode = #tpu.pipeline_mode<synchronous>, transform_indices = @transform_5, window_bounds = array<i64: 8, 128>}, {transform_indices = @transform_6, window_bounds = array<i64: 1, 32, 128>}]} {
    %c0 = arith.constant 0 : index
    %c0_0 = arith.constant 0 : index
    %0 = vector.load %arg7[%c0, %c0_0] : memref<8x128xf32, #tpu.memory_space<vmem>>, vector<8x128xf32>
    %1 = vector.extract_strided_slice %0 {offsets = [0, 0], sizes = [1, 128], strides = [1, 1]} : vector<8x128xf32> to vector<1x128xf32>
    %2 = vector.extract_strided_slice %0 {offsets = [1, 0], sizes = [1, 128], strides = [1, 1]} : vector<8x128xf32> to vector<1x128xf32>
    %3 = vector.extract_strided_slice %0 {offsets = [2, 0], sizes = [1, 128], strides = [1, 1]} : vector<8x128xf32> to vector<1x128xf32>
    %4 = vector.extract_strided_slice %0 {offsets = [3, 0], sizes = [1, 128], strides = [1, 1]} : vector<8x128xf32> to vector<1x128xf32>
    %5 = vector.extract_strided_slice %0 {offsets = [4, 0], sizes = [1, 128], strides = [1, 1]} : vector<8x128xf32> to vector<1x128xf32>
    %6 = vector.extract_strided_slice %0 {offsets = [5, 0], sizes = [1, 128], strides = [1, 1]} : vector<8x128xf32> to vector<1x128xf32>
    %7 = vector.extract_strided_slice %0 {offsets = [6, 0], sizes = [1, 128], strides = [1, 1]} : vector<8x128xf32> to vector<1x128xf32>
    %c0_1 = arith.constant 0 : index
    %c0_2 = arith.constant 0 : index
    %c0_3 = arith.constant 0 : index
    %8 = vector.load %arg2[%c0_1, %c0_2, %c0_3] : memref<1x32x128xbf16, #tpu.memory_space<vmem>>, vector<1x32x128xbf16>
    %9 = vector.shape_cast %8 : vector<1x32x128xbf16> to vector<32x128xbf16>
    %c0_4 = arith.constant 0 : index
    %c0_5 = arith.constant 0 : index
    %c0_6 = arith.constant 0 : index
    %c0_7 = arith.constant 0 : index
    %10 = vector.load %arg3[%c0_4, %c0_5, %c0_6, %c0_7] : memref<1x1x8x128xbf16, #tpu.memory_space<vmem>>, vector<1x1x8x128xbf16>
    %11 = vector.shape_cast %10 : vector<1x1x8x128xbf16> to vector<8x128xbf16>
    %12 = tpu.concatenate %9, %11 in 0 : vector<32x128xbf16>, vector<8x128xbf16> -> vector<40x128xbf16>
    %13 = arith.extf %12 : vector<40x128xbf16> to vector<40x128xf32>
    %cst = arith.constant dense<0.000000e+00> : vector<40xf32>
    %14 = vector.multi_reduction <add>, %13, %cst [1] : vector<40x128xf32> to vector<40xf32>
    %15 = vector.shape_cast %14 : vector<40xf32> to vector<40x1xf32>
    %cst_8 = arith.constant 1.280000e+02 : f32
    %16 = vector.broadcast %cst_8 : f32 to vector<40x1xf32>
    %17 = arith.divf %15, %16 : vector<40x1xf32>
    %18 = vector.broadcast %17 : vector<40x1xf32> to vector<40x128xf32>
    %19 = arith.subf %13, %18 : vector<40x128xf32>
    %20 = arith.mulf %19, %19 : vector<40x128xf32>
    %cst_9 = arith.constant dense<0.000000e+00> : vector<40xf32>
    %21 = vector.multi_reduction <add>, %20, %cst_9 [1] : vector<40x128xf32> to vector<40xf32>
    %22 = vector.shape_cast %21 : vector<40xf32> to vector<40x1xf32>
    %cst_10 = arith.constant 1.280000e+02 : f32
    %23 = vector.broadcast %cst_10 : f32 to vector<40x1xf32>
    %24 = arith.divf %22, %23 : vector<40x1xf32>
    %cst_11 = arith.constant 9.99999974E-6 : f32
    %25 = vector.broadcast %cst_11 : f32 to vector<40x1xf32>
    %26 = arith.addf %24, %25 : vector<40x1xf32>
    %27 = math.rsqrt %26 : vector<40x1xf32>
    %28 = vector.broadcast %27 : vector<40x1xf32> to vector<40x128xf32>
    %29 = arith.mulf %19, %28 : vector<40x128xf32>
    %30 = arith.truncf %29 : vector<40x128xf32> to vector<40x128xbf16>
    %c0_12 = arith.constant 0 : index
    %c0_13 = arith.constant 0 : index
    %31 = vector.load %arg4[%c0_12, %c0_13] : memref<128x128xbf16, #tpu.memory_space<vmem>>, vector<128x128xbf16>
    %cst_14 = arith.constant dense<0.000000e+00> : vector<40x128xf32>
    %32 = tpu.matmul %30, %31, %cst_14 {dimension_numbers = #tpu.dot_dimension_numbers<[1], [0], [0], [1], [0, 0, 1, 1], [], []>} : vector<40x128xbf16>, vector<128x128xbf16>, vector<40x128xf32> -> vector<40x128xf32>
    %33 = vector.broadcast %1 : vector<1x128xf32> to vector<40x128xf32>
    %34 = arith.addf %32, %33 : vector<40x128xf32>
    %c0_15 = arith.constant 0 : index
    %c0_16 = arith.constant 0 : index
    %35 = vector.load %arg5[%c0_15, %c0_16] : memref<128x128xbf16, #tpu.memory_space<vmem>>, vector<128x128xbf16>
    %cst_17 = arith.constant dense<0.000000e+00> : vector<40x128xf32>
    %36 = tpu.matmul %30, %35, %cst_17 {dimension_numbers = #tpu.dot_dimension_numbers<[1], [0], [0], [1], [0, 0, 1, 1], [], []>} : vector<40x128xbf16>, vector<128x128xbf16>, vector<40x128xf32> -> vector<40x128xf32>
    %37 = vector.broadcast %2 : vector<1x128xf32> to vector<40x128xf32>
    %38 = arith.addf %36, %37 : vector<40x128xf32>
    %cst_18 = arith.constant 5.000000e-01 : f32
    %39 = vector.broadcast %cst_18 : f32 to vector<40x128xf32>
    %40 = arith.mulf %39, %38 : vector<40x128xf32>
    %41 = math.tanh %40 : vector<40x128xf32>
    %cst_19 = arith.constant 1.000000e+00 : f32
    %42 = vector.broadcast %cst_19 : f32 to vector<40x128xf32>
    %43 = arith.addf %41, %42 : vector<40x128xf32>
    %cst_20 = arith.constant 5.000000e-01 : f32
    %44 = vector.broadcast %cst_20 : f32 to vector<40x128xf32>
    %45 = arith.mulf %44, %43 : vector<40x128xf32>
    %46 = arith.mulf %34, %45 : vector<40x128xf32>
    %47 = vector.extract_strided_slice %46 {offsets = [0, 0], sizes = [32, 128], strides = [1, 1]} : vector<40x128xf32> to vector<32x128xf32>
    %48 = vector.extract_strided_slice %46 {offsets = [32, 0], sizes = [1, 128], strides = [1, 1]} : vector<40x128xf32> to vector<1x128xf32>
    %49 = vector.extract_strided_slice %46 {offsets = [33, 0], sizes = [1, 128], strides = [1, 1]} : vector<40x128xf32> to vector<1x128xf32>
    %c0_i32 = arith.constant 0 : i32
    %50 = arith.cmpi sgt, %arg1, %c0_i32 : i32
    %51 = arith.extui %50 : i1 to i32
    %52 = arith.sitofp %51 : i32 to f32
    %c1_i32 = arith.constant 1 : i32
    %53 = arith.addi %arg1, %c1_i32 : i32
    %c32_i32 = arith.constant 32 : i32
    %54 = arith.muli %53, %c32_i32 : i32
    %c64_i32 = arith.constant 64 : i32
    %55 = arith.cmpi slt, %54, %c64_i32 : i32
    %56 = arith.extui %55 : i1 to i32
    %57 = arith.sitofp %56 : i32 to f32
    %58 = vector.broadcast %52 : f32 to vector<1x128xf32>
    %59 = arith.mulf %48, %58 : vector<1x128xf32>
    %60 = vector.broadcast %57 : f32 to vector<1x128xf32>
    %61 = arith.mulf %49, %60 : vector<1x128xf32>
    %62 = vector.extract_strided_slice %47 {offsets = [0, 0], sizes = [31, 128], strides = [1, 1]} : vector<32x128xf32> to vector<31x128xf32>
    %63 = tpu.concatenate %59, %62 in 0 : vector<1x128xf32>, vector<31x128xf32> -> vector<32x128xf32>
    %64 = vector.extract_strided_slice %47 {offsets = [1, 0], sizes = [31, 128], strides = [1, 1]} : vector<32x128xf32> to vector<31x128xf32>
    %65 = tpu.concatenate %64, %61 in 0 : vector<31x128xf32>, vector<1x128xf32> -> vector<32x128xf32>
    %66 = vector.broadcast %3 : vector<1x128xf32> to vector<32x128xf32>
    %67 = arith.mulf %63, %66 : vector<32x128xf32>
    %68 = vector.broadcast %4 : vector<1x128xf32> to vector<32x128xf32>
    %69 = arith.mulf %47, %68 : vector<32x128xf32>
    %70 = arith.addf %67, %69 : vector<32x128xf32>
    %71 = vector.broadcast %5 : vector<1x128xf32> to vector<32x128xf32>
    %72 = arith.mulf %65, %71 : vector<32x128xf32>
    %73 = arith.addf %70, %72 : vector<32x128xf32>
    %74 = vector.broadcast %6 : vector<1x128xf32> to vector<32x128xf32>
    %75 = arith.addf %73, %74 : vector<32x128xf32>
    %cst_21 = arith.constant 5.000000e-01 : f32
    %76 = vector.broadcast %cst_21 : f32 to vector<32x128xf32>
    %77 = arith.mulf %76, %75 : vector<32x128xf32>
    %78 = math.tanh %77 : vector<32x128xf32>
    %cst_22 = arith.constant 1.000000e+00 : f32
    %79 = vector.broadcast %cst_22 : f32 to vector<32x128xf32>
    %80 = arith.addf %78, %79 : vector<32x128xf32>
    %cst_23 = arith.constant 5.000000e-01 : f32
    %81 = vector.broadcast %cst_23 : f32 to vector<32x128xf32>
    %82 = arith.mulf %81, %80 : vector<32x128xf32>
    %83 = arith.mulf %75, %82 : vector<32x128xf32>
    %84 = arith.truncf %83 : vector<32x128xf32> to vector<32x128xbf16>
    %c0_24 = arith.constant 0 : index
    %c0_25 = arith.constant 0 : index
    %85 = vector.load %arg6[%c0_24, %c0_25] : memref<128x128xbf16, #tpu.memory_space<vmem>>, vector<128x128xbf16>
    %cst_26 = arith.constant dense<0.000000e+00> : vector<32x128xf32>
    %86 = tpu.matmul %84, %85, %cst_26 {dimension_numbers = #tpu.dot_dimension_numbers<[1], [0], [0], [1], [0, 0, 1, 1], [], []>} : vector<32x128xbf16>, vector<128x128xbf16>, vector<32x128xf32> -> vector<32x128xf32>
    %87 = vector.broadcast %7 : vector<1x128xf32> to vector<32x128xf32>
    %88 = arith.addf %86, %87 : vector<32x128xf32>
    %89 = arith.truncf %88 : vector<32x128xf32> to vector<32x128xbf16>
    %c0_27 = arith.constant 0 : index
    %c0_28 = arith.constant 0 : index
    %c0_29 = arith.constant 0 : index
    %90 = vector.load %arg8[%c0_27, %c0_28, %c0_29] : memref<1x32x128xbf16, #tpu.memory_space<vmem>>, vector<1x32x128xbf16>
    %91 = vector.shape_cast %90 : vector<1x32x128xbf16> to vector<32x128xbf16>
    %92 = vector.shape_cast %89 : vector<32x128xbf16> to vector<1x32x128xbf16>
    tpu.vector_store %arg8[%c0_27, %c0_28, %c0_29], %92 {strides = array<i32>} : memref<1x32x128xbf16, #tpu.memory_space<vmem>>, vector<1x32x128xbf16>,
    return
  }
  func.func @transform_0(%arg0: i32, %arg1: i32) -> (i32, i32, i32) {
    %c0_i32 = arith.constant 0 : i32
    %c0_i32_0 = arith.constant 0 : i32
    return %arg0, %arg1, %c0_i32 : i32, i32, i32
  }
  func.func @transform_1(%arg0: i32, %arg1: i32) -> (i32, i32, i32, i32) {
    %c0_i32 = arith.constant 0 : i32
    %c0_i32_0 = arith.constant 0 : i32
    %c0_i32_1 = arith.constant 0 : i32
    return %arg0, %arg1, %c0_i32, %c0_i32_0 : i32, i32, i32, i32
  }
  func.func @transform_2(%arg0: i32, %arg1: i32) -> (i32, i32) {
    %c0_i32 = arith.constant 0 : i32
    %c0_i32_0 = arith.constant 0 : i32
    %c0_i32_1 = arith.constant 0 : i32
    return %c0_i32, %c0_i32_0 : i32, i32
  }
  func.func @transform_3(%arg0: i32, %arg1: i32) -> (i32, i32) {
    %c0_i32 = arith.constant 0 : i32
    %c0_i32_0 = arith.constant 0 : i32
    %c0_i32_1 = arith.constant 0 : i32
    return %c0_i32, %c0_i32_0 : i32, i32
  }
  func.func @transform_4(%arg0: i32, %arg1: i32) -> (i32, i32) {
    %c0_i32 = arith.constant 0 : i32
    %c0_i32_0 = arith.constant 0 : i32
    %c0_i32_1 = arith.constant 0 : i32
    return %c0_i32, %c0_i32_0 : i32, i32
  }
  func.func @transform_5(%arg0: i32, %arg1: i32) -> (i32, i32) {
    %c0_i32 = arith.constant 0 : i32
    %c0_i32_0 = arith.constant 0 : i32
    %c0_i32_1 = arith.constant 0 : i32
    return %c0_i32, %c0_i32_0 : i32, i32
  }
  func.func @transform_6(%arg0: i32, %arg1: i32) -> (i32, i32, i32) {
    %c0_i32 = arith.constant 0 : i32
    %c0_i32_0 = arith.constant 0 : i32
    return %arg0, %arg1, %c0_i32 : i32, i32, i32
  }
}

module attributes {stable_mosaic.version = 11 : i64} {
  func.func @_conv_module_kernel(%arg0: i32, %arg1: i32, %arg2: memref<1x32x128xbf16, #tpu.memory_space<vmem>>, %arg3: memref<1x1x8x128xbf16, #tpu.memory_space<vmem>>, %arg4: memref<128x128xbf16, #tpu.memory_space<vmem>>, %arg5: memref<128x128xbf16, #tpu.memory_space<vmem>>, %arg6: memref<128x128xbf16, #tpu.memory_space<vmem>>, %arg7: memref<8x128xf32, #tpu.memory_space<vmem>>, %arg8: memref<1x32x128xbf16, #tpu.memory_space<vmem>>) attributes {dimension_semantics = [#tpu.dimension_semantics<parallel>, #tpu.dimension_semantics<parallel>], iteration_bounds = array<i64: 2, 2>, scalar_prefetch = 0 : i64, scratch_operands = 0 : i64, tpu.core_type = #tpu.core_type<tc>, window_params = [{transform_indices = @transform_0, window_bounds = array<i64: 1, 32, 128>}, {transform_indices = @transform_1, window_bounds = array<i64: 1, 1, 8, 128>}, {pipeline_mode = #tpu.pipeline_mode<synchronous>, transform_indices = @transform_2, window_bounds = array<i64: 128, 128>}, {pipeline_mode = #tpu.pipeline_mode<synchronous>, transform_indices = @transform_3, window_bounds = array<i64: 128, 128>}, {pipeline_mode = #tpu.pipeline_mode<synchronous>, transform_indices = @transform_4, window_bounds = array<i64: 128, 128>}, {pipeline_mode = #tpu.pipeline_mode<synchronous>, transform_indices = @transform_5, window_bounds = array<i64: 8, 128>}, {transform_indices = @transform_6, window_bounds = array<i64: 1, 32, 128>}]} {
    %c0 = arith.constant 0 : index
    %c0_0 = arith.constant 0 : index
    %0 = vector.load %arg7[%c0, %c0_0] : memref<8x128xf32, #tpu.memory_space<vmem>>, vector<8x128xf32>
    %1 = vector.extract_strided_slice %0 {offsets = [0, 0], sizes = [1, 128], strides = [1, 1]} : vector<8x128xf32> to vector<1x128xf32>
    %2 = vector.extract_strided_slice %0 {offsets = [1, 0], sizes = [1, 128], strides = [1, 1]} : vector<8x128xf32> to vector<1x128xf32>
    %3 = vector.extract_strided_slice %0 {offsets = [2, 0], sizes = [1, 128], strides = [1, 1]} : vector<8x128xf32> to vector<1x128xf32>
    %4 = vector.extract_strided_slice %0 {offsets = [3, 0], sizes = [1, 128], strides = [1, 1]} : vector<8x128xf32> to vector<1x128xf32>
    %5 = vector.extract_strided_slice %0 {offsets = [4, 0], sizes = [1, 128], strides = [1, 1]} : vector<8x128xf32> to vector<1x128xf32>
    %6 = vector.extract_strided_slice %0 {offsets = [5, 0], sizes = [1, 128], strides = [1, 1]} : vector<8x128xf32> to vector<1x128xf32>
    %7 = vector.extract_strided_slice %0 {offsets = [6, 0], sizes = [1, 128], strides = [1, 1]} : vector<8x128xf32> to vector<1x128xf32>
    %c0_1 = arith.constant 0 : index
    %c0_2 = arith.constant 0 : index
    %c0_3 = arith.constant 0 : index
    %8 = vector.load %arg2[%c0_1, %c0_2, %c0_3] : memref<1x32x128xbf16, #tpu.memory_space<vmem>>, vector<1x32x128xbf16>
    %9 = vector.shape_cast %8 : vector<1x32x128xbf16> to vector<32x128xbf16>
    %c0_4 = arith.constant 0 : index
    %c0_5 = arith.constant 0 : index
    %c0_6 = arith.constant 0 : index
    %c0_7 = arith.constant 0 : index
    %10 = vector.load %arg3[%c0_4, %c0_5, %c0_6, %c0_7] : memref<1x1x8x128xbf16, #tpu.memory_space<vmem>>, vector<1x1x8x128xbf16>
    %11 = vector.shape_cast %10 : vector<1x1x8x128xbf16> to vector<8x128xbf16>
    %12 = tpu.concatenate %9, %11 in 0 : vector<32x128xbf16>, vector<8x128xbf16> -> vector<40x128xbf16>
    %13 = arith.extf %12 : vector<40x128xbf16> to vector<40x128xf32>
    %cst = arith.constant dense<0.000000e+00> : vector<40xf32>
    %14 = vector.multi_reduction <add>, %13, %cst [1] : vector<40x128xf32> to vector<40xf32>
    %15 = vector.shape_cast %14 : vector<40xf32> to vector<40x1xf32>
    %cst_8 = arith.constant 1.280000e+02 : f32
    %16 = vector.broadcast %cst_8 : f32 to vector<40x1xf32>
    %17 = arith.divf %15, %16 : vector<40x1xf32>
    %18 = vector.broadcast %17 : vector<40x1xf32> to vector<40x128xf32>
    %19 = arith.subf %13, %18 : vector<40x128xf32>
    %20 = arith.mulf %19, %19 : vector<40x128xf32>
    %cst_9 = arith.constant dense<0.000000e+00> : vector<40xf32>
    %21 = vector.multi_reduction <add>, %20, %cst_9 [1] : vector<40x128xf32> to vector<40xf32>
    %22 = vector.shape_cast %21 : vector<40xf32> to vector<40x1xf32>
    %cst_10 = arith.constant 1.280000e+02 : f32
    %23 = vector.broadcast %cst_10 : f32 to vector<40x1xf32>
    %24 = arith.divf %22, %23 : vector<40x1xf32>
    %cst_11 = arith.constant 9.99999974E-6 : f32
    %25 = vector.broadcast %cst_11 : f32 to vector<40x1xf32>
    %26 = arith.addf %24, %25 : vector<40x1xf32>
    %27 = math.rsqrt %26 : vector<40x1xf32>
    %28 = vector.broadcast %27 : vector<40x1xf32> to vector<40x128xf32>
    %29 = arith.mulf %19, %28 : vector<40x128xf32>
    %30 = arith.truncf %29 : vector<40x128xf32> to vector<40x128xbf16>
    %c0_12 = arith.constant 0 : index
    %c0_13 = arith.constant 0 : index
    %31 = vector.load %arg4[%c0_12, %c0_13] : memref<128x128xbf16, #tpu.memory_space<vmem>>, vector<128x128xbf16>
    %cst_14 = arith.constant dense<0.000000e+00> : vector<40x128xf32>
    %32 = tpu.matmul %30, %31, %cst_14 {dimension_numbers = #tpu.dot_dimension_numbers<[1], [0], [0], [1], [0, 0, 1, 1], [], []>} : vector<40x128xbf16>, vector<128x128xbf16>, vector<40x128xf32> -> vector<40x128xf32>
    %33 = vector.broadcast %1 : vector<1x128xf32> to vector<40x128xf32>
    %34 = arith.addf %32, %33 : vector<40x128xf32>
    %c0_15 = arith.constant 0 : index
    %c0_16 = arith.constant 0 : index
    %35 = vector.load %arg5[%c0_15, %c0_16] : memref<128x128xbf16, #tpu.memory_space<vmem>>, vector<128x128xbf16>
    %cst_17 = arith.constant dense<0.000000e+00> : vector<40x128xf32>
    %36 = tpu.matmul %30, %35, %cst_17 {dimension_numbers = #tpu.dot_dimension_numbers<[1], [0], [0], [1], [0, 0, 1, 1], [], []>} : vector<40x128xbf16>, vector<128x128xbf16>, vector<40x128xf32> -> vector<40x128xf32>
    %37 = vector.broadcast %2 : vector<1x128xf32> to vector<40x128xf32>
    %38 = arith.addf %36, %37 : vector<40x128xf32>
    %cst_18 = arith.constant 5.000000e-01 : f32
    %39 = vector.broadcast %cst_18 : f32 to vector<40x128xf32>
    %40 = arith.mulf %39, %38 : vector<40x128xf32>
    %41 = math.tanh %40 : vector<40x128xf32>
    %cst_19 = arith.constant 1.000000e+00 : f32
    %42 = vector.broadcast %cst_19 : f32 to vector<40x128xf32>
    %43 = arith.addf %41, %42 : vector<40x128xf32>
    %cst_20 = arith.constant 5.000000e-01 : f32
    %44 = vector.broadcast %cst_20 : f32 to vector<40x128xf32>
    %45 = arith.mulf %44, %43 : vector<40x128xf32>
    %46 = arith.mulf %34, %45 : vector<40x128xf32>
    %47 = vector.extract_strided_slice %46 {offsets = [0, 0], sizes = [32, 128], strides = [1, 1]} : vector<40x128xf32> to vector<32x128xf32>
    %48 = vector.extract_strided_slice %46 {offsets = [32, 0], sizes = [1, 128], strides = [1, 1]} : vector<40x128xf32> to vector<1x128xf32>
    %49 = vector.extract_strided_slice %46 {offsets = [33, 0], sizes = [1, 128], strides = [1, 1]} : vector<40x128xf32> to vector<1x128xf32>
    %c0_i32 = arith.constant 0 : i32
    %50 = arith.cmpi sgt, %arg1, %c0_i32 : i32
    %51 = arith.extui %50 : i1 to i32
    %52 = arith.sitofp %51 : i32 to f32
    %c1_i32 = arith.constant 1 : i32
    %53 = arith.addi %arg1, %c1_i32 : i32
    %c32_i32 = arith.constant 32 : i32
    %54 = arith.muli %53, %c32_i32 : i32
    %c64_i32 = arith.constant 64 : i32
    %55 = arith.cmpi slt, %54, %c64_i32 : i32
    %56 = arith.extui %55 : i1 to i32
    %57 = arith.sitofp %56 : i32 to f32
    %58 = vector.broadcast %52 : f32 to vector<1x128xf32>
    %59 = arith.mulf %48, %58 : vector<1x128xf32>
    %60 = vector.broadcast %57 : f32 to vector<1x128xf32>
    %61 = arith.mulf %49, %60 : vector<1x128xf32>
    %62 = vector.extract_strided_slice %47 {offsets = [0, 0], sizes = [31, 128], strides = [1, 1]} : vector<32x128xf32> to vector<31x128xf32>
    %63 = tpu.concatenate %59, %62 in 0 : vector<1x128xf32>, vector<31x128xf32> -> vector<32x128xf32>
    %64 = vector.extract_strided_slice %47 {offsets = [1, 0], sizes = [31, 128], strides = [1, 1]} : vector<32x128xf32> to vector<31x128xf32>
    %65 = tpu.concatenate %64, %61 in 0 : vector<31x128xf32>, vector<1x128xf32> -> vector<32x128xf32>
    %66 = vector.broadcast %3 : vector<1x128xf32> to vector<32x128xf32>
    %67 = arith.mulf %63, %66 : vector<32x128xf32>
    %68 = vector.broadcast %4 : vector<1x128xf32> to vector<32x128xf32>
    %69 = arith.mulf %47, %68 : vector<32x128xf32>
    %70 = arith.addf %67, %69 : vector<32x128xf32>
    %71 = vector.broadcast %5 : vector<1x128xf32> to vector<32x128xf32>
    %72 = arith.mulf %65, %71 : vector<32x128xf32>
    %73 = arith.addf %70, %72 : vector<32x128xf32>
    %74 = vector.broadcast %6 : vector<1x128xf32> to vector<32x128xf32>
    %75 = arith.addf %73, %74 : vector<32x128xf32>
    %cst_21 = arith.constant 5.000000e-01 : f32
    %76 = vector.broadcast %cst_21 : f32 to vector<32x128xf32>
    %77 = arith.mulf %76, %75 : vector<32x128xf32>
    %78 = math.tanh %77 : vector<32x128xf32>
    %cst_22 = arith.constant 1.000000e+00 : f32
    %79 = vector.broadcast %cst_22 : f32 to vector<32x128xf32>
    %80 = arith.addf %78, %79 : vector<32x128xf32>
    %cst_23 = arith.constant 5.000000e-01 : f32
    %81 = vector.broadcast %cst_23 : f32 to vector<32x128xf32>
    %82 = arith.mulf %81, %80 : vector<32x128xf32>
    %83 = arith.mulf %75, %82 : vector<32x128xf32>
    %84 = arith.truncf %83 : vector<32x128xf32> to vector<32x128xbf16>
    %c0_24 = arith.constant 0 : index
    %c0_25 = arith.constant 0 : index
    %85 = vector.load %arg6[%c0_24, %c0_25] : memref<128x128xbf16, #tpu.memory_space<vmem>>, vector<128x128xbf16>
    %cst_26 = arith.constant dense<0.000000e+00> : vector<32x128xf32>
    %86 = tpu.matmul %84, %85, %cst_26 {dimension_numbers = #tpu.dot_dimension_numbers<[1], [0], [0], [1], [0, 0, 1, 1], [], []>} : vector<32x128xbf16>, vector<128x128xbf16>, vector<32x128xf32> -> vector<32x128xf32>
    %87 = vector.broadcast %7 : vector<1x128xf32> to vector<32x128xf32>
    %88 = arith.addf %86, %87 : vector<32x128xf32>
    %89 = arith.truncf %88 : vector<32x128xf32> to vector<32x128xbf16>
    %c0_27 = arith.constant 0 : index
    %c0_28 = arith.constant 0 : index
    %c0_29 = arith.constant 0 : index
    %90 = vector.load %arg8[%c0_27, %c0_28, %c0_29] : memref<1x32x128xbf16, #tpu.memory_space<vmem>>, vector<1x32x128xbf16>
    %91 = vector.shape_cast %90 : vector<1x32x128xbf16> to vector<32x128xbf16>
    %92 = vector.shape_cast %89 : vector<32x128xbf16> to vector<1x32x128xbf16>
    tpu.vector_store %arg8[%c0_27, %c0_28, %c0_29], %92 {strides = array<i32>} : memref<1x32x128xbf16, #tpu.memory_space<vmem>>, vector<1x32x128xbf16>,
    return
  }
  func.func @transform_0(%arg0: i32, %arg1: i32) -> (i32, i32, i32) {
    %c0_i32 = arith.constant 0 : i32
    %c0_i32_0 = arith.constant 0 : i32
    return %arg0, %arg1, %c0_i32 : i32, i32, i32
  }
  func.func @transform_1(%arg0: i32, %arg1: i32) -> (i32, i32, i32, i32) {
    %c0_i32 = arith.constant 0 : i32
    %c0_i32_0 = arith.constant 0 : i32
    %c0_i32_1 = arith.constant 0 : i32
    return %arg0, %arg1, %c0_i32, %c0_i32_0 : i32, i32, i32, i32
  }
  func.func @transform_2(%arg0: i32, %arg1: i32) -> (i32, i32) {
    %c0_i32 = arith.constant 0 : i32
    %c0_i32_0 = arith.constant 0 : i32
    %c0_i32_1 = arith.constant 0 : i32
    return %c0_i32, %c0_i32_0 : i32, i32
  }
  func.func @transform_3(%arg0: i32, %arg1: i32) -> (i32, i32) {
    %c0_i32 = arith.constant 0 : i32
    %c0_i32_0 = arith.constant 0 : i32
    %c0_i32_1 = arith.constant 0 : i32
    return %c0_i32, %c0_i32_0 : i32, i32
  }
  func.func @transform_4(%arg0: i32, %arg1: i32) -> (i32, i32) {
    %c0_i32 = arith.constant 0 : i32
    %c0_i32_0 = arith.constant 0 : i32
    %c0_i32_1 = arith.constant 0 : i32
    return %c0_i32, %c0_i32_0 : i32, i32
  }
  func.func @transform_5(%arg0: i32, %arg1: i32) -> (i32, i32) {
    %c0_i32 = arith.constant 0 : i32
    %c0_i32_0 = arith.constant 0 : i32
    %c0_i32_1 = arith.constant 0 : i32
    return %c0_i32, %c0_i32_0 : i32, i32
  }
  func.func @transform_6(%arg0: i32, %arg1: i32) -> (i32, i32, i32) {
    %c0_i32 = arith.constant 0 : i32
    %c0_i32_0 = arith.constant 0 : i32
    return %arg0, %arg1, %c0_i32 : i32, i32, i32
  }
}

</mosaic_0001>

<llo_original>
// kernel: tpu_custom_call.1
$region0: #{tpu_custom_call.1}
  #allocation0 [shape = 'u32[]', space=smem, size = 0x4, offset = 0x4, fixed_abs, tag = 'smem constant byte address 0x4 - core index']
  #allocation1 [shape = 'u32[72,128]{1,0:T(1,128)}', space=vmem, size = 0x9000, scoped, tag = 'internal scratch']
  %s0 = inlined_call_operand.hbm [shape: f32[32,128], index: 0, kind: input, shape index: {}]
  %s1 = inlined_call_operand.hbm [shape: f32[32,128], index: 1, kind: output, shape index: {}]
  %s2 = sld [smem:[#allocation0]]
  $region18: #{tpu_custom_call.1} parent=0
    _
  %s4 = ssub.s32 1, %s2
  %s5 = scalar_select 0, %s4, %s2
  $region1: #{tpu_custom_call.1} parent=0
    #allocation2 [shape = 'u8[16384]{0}', space=vmem, size = 0x4000, scoped, tag = 'input window, operand 0, single buffered']
    #allocation3 [shape = 's32[1]{0}', space=sflag, size = 0x4, scoped, tag = 'scoped memory for tpu_custom_call.1']
    #allocation4 [shape = 's32[1]{0}', space=sflag, size = 0x4, scoped, tag = 'scoped memory for tpu_custom_call.1']
    #allocation5 [shape = 'u8[16384]{0}', space=vmem, size = 0x4000, scoped, tag = 'output window, operand 0, single buffered']
    %6 = vsyncpa [#allocation3], 0
    %7 = vsyncpa [#allocation4], 0
    // Predicated region
    $region2: #{tpu_custom_call.1} parent=1 // pred_check
      _
    $region3: #{tpu_custom_call.1} parent=1 // pred_check_branch
      %9 = sbr.rel (0) target = $region5
    $region4: #{tpu_custom_call.1} parent=1 // pred_region
      %11 = vsyncadd [#allocation3], 0
      %s12 = sshll.u32 %s0, 4
      %s13 = int_to_ptr.hbm [resolvable:$true] %s12
      %s14 = sshll.u32 [#allocation2], 4
      %s15 = int_to_ptr.vmem [resolvable:$true] %s14
      %20 = dma.hbm_to_vmem [thread:$0]  %s13, 512, %s15, [#allocation3], 128, 128, 8
    $region5: #{tpu_custom_call.1} parent=1 // pred_fallthru
      _
    // Predicated region
    $region6: #{tpu_custom_call.1} parent=1 // pred_check
      _
    $region7: #{tpu_custom_call.1} parent=1 // pred_check_branch
      %22 = sbr.rel (0) target = $region9
    $region8: #{tpu_custom_call.1} parent=1 // pred_region
      %24 = dma.done [#allocation3], 512
    $region9: #{tpu_custom_call.1} parent=1 // pred_fallthru
      _
    %v25 = vld [vmem:[#allocation2] sm:$0xff]
    %v26 = vld [vmem:[#allocation2 + $0x8] sm:$0xff]
    %v27 = vld [vmem:[#allocation2 + $0x10] sm:$0xff]
    %v28 = vld [vmem:[#allocation2 + $0x18] sm:$0xff]
    %v29 = vrot.slane %v25, 7
    %v30 = vrot.slane %v26, 7
    %v31 = vrot.slane %v27, 7
    %v32 = vrot.slane %v28, 7
    %v33 = vlaneseq
    %v34 = vshrl.u32 %v33, 7
    %vm35 = vcmp.lt.s32.totalorder %v34, 1
    %v36 = vsel %vm35, %v31, %v32
    %v37 = vsel %vm35, %v30, %v31
    %v38 = vsel %vm35, %v29, %v30
    %v39 = vsel %vm35, %v32, %v29
    %40 = vst [vmem:[#allocation5] sm:$0xff] %v39
    %41 = vst [vmem:[#allocation5 + $0x8] sm:$0xff] %v38
    %42 = vst [vmem:[#allocation5 + $0x10] sm:$0xff] %v37
    %43 = vst [vmem:[#allocation5 + $0x18] sm:$0xff] %v36
    // Predicated region
    $region10: #{tpu_custom_call.1} parent=1 // pred_check
      _
    $region11: #{tpu_custom_call.1} parent=1 // pred_check_branch
      %45 = sbr.rel (0) target = $region13
    $region12: #{tpu_custom_call.1} parent=1 // pred_region
      %47 = vsyncadd [#allocation4], 0
      %s48 = sshll.u32 [#allocation5], 4
      %s49 = int_to_ptr.vmem [resolvable:$true] %s48
      %s50 = sshll.u32 %s1, 4
      %s51 = int_to_ptr.hbm [resolvable:$true] %s50
      %56 = dma.vmem_to_hbm [thread:$0]  %s49, 512, %s51, [#allocation4], 128, 128, 8
    $region13: #{tpu_custom_call.1} parent=1 // pred_fallthru
      _
    // Predicated region
    $region14: #{tpu_custom_call.1} parent=1 // pred_check
      _
    $region15: #{tpu_custom_call.1} parent=1 // pred_check_branch
      %58 = sbr.rel (0) target = $region17
    $region16: #{tpu_custom_call.1} parent=1 // pred_region
      %60 = dma.done [#allocation4], 512
    $region17: #{tpu_custom_call.1} parent=1 // pred_fallthru
      _
    %61 = vsyncpa [#allocation3], 1
    %62 = vsyncpa [#allocation4], 1

// kernel: tpu_custom_call.1
$region0: #{tpu_custom_call.1}
  #allocation0 [shape = 'u32[]', space=smem, size = 0x4, offset = 0x4, fixed_abs, tag = 'smem constant byte address 0x4 - core index']
  #allocation1 [shape = 'u32[72,128]{1,0:T(1,128)}', space=vmem, size = 0x9000, scoped, tag = 'internal scratch']
  %s0 = inlined_call_operand.hbm [shape: bf16[2,64,128], index: 0, kind: input, shape index: {}]
  %s1 = inlined_call_operand.hbm [shape: bf16[2,2,8,128], index: 1, kind: input, shape index: {}]
  %s2 = inlined_call_operand.hbm [shape: bf16[128,128], index: 2, kind: input, shape index: {}]
  %s3 = inlined_call_operand.hbm [shape: bf16[128,128], index: 3, kind: input, shape index: {}]
  %s4 = inlined_call_operand.hbm [shape: bf16[128,128], index: 4, kind: input, shape index: {}]
  %s5 = inlined_call_operand.hbm [shape: f32[8,128], index: 5, kind: input, shape index: {}]
  %s6 = inlined_call_operand.hbm [shape: bf16[2,64,128], index: 6, kind: output, shape index: {}]
  %s7 = sld [smem:[#allocation0]]
  $region81: #{tpu_custom_call.1} parent=0
    _
  %s9 = ssub.s32 1, %s7
  %s10 = scalar_select 0, %s9, %s7
  $region1: #{tpu_custom_call.1} parent=0
    #allocation2 [shape = 'u8[16384]{0}', space=vmem, size = 0x4000, scoped, tag = 'input window, operand 0']
    #allocation3 [shape = 's32[2]{0}', space=sflag, size = 0x8, scoped, tag = 'scoped memory for tpu_custom_call.1']
    #allocation4 [shape = 's32[2]{0}', space=sflag, size = 0x8, scoped, tag = 'scoped memory for tpu_custom_call.1']
    #allocation5 [shape = 'u8[4096]{0}', space=vmem, size = 0x1000, scoped, tag = 'input window, operand 1']
    #allocation6 [shape = 's32[2]{0}', space=sflag, size = 0x8, scoped, tag = 'scoped memory for tpu_custom_call.1']
    #allocation7 [shape = 'u8[32768]{0}', space=vmem, size = 0x8000, scoped, tag = 'input window, operand 2, single buffered']
    #allocation8 [shape = 'u8[32768]{0}', space=vmem, size = 0x8000, scoped, tag = 'input window, operand 3, single buffered']
    #allocation9 [shape = 's32[1]{0}', space=sflag, size = 0x4, scoped, tag = 'scoped memory for tpu_custom_call.1']
    #allocation10 [shape = 'u8[32768]{0}', space=vmem, size = 0x8000, scoped, tag = 'input window, operand 4, single buffered']
    #allocation11 [shape = 'u8[4096]{0}', space=vmem, size = 0x1000, scoped, tag = 'input window, operand 5, single buffered']
    #allocation12 [shape = 's32[1]{0}', space=sflag, size = 0x4, scoped, tag = 'scoped memory for tpu_custom_call.1']
    #allocation13 [shape = 'u8[16384]{0}', space=vmem, size = 0x4000, scoped, tag = 'output window, operand 0']
    %11 = vsyncpa [#allocation3], 0
    %s12 = scalar_lea.sflag [#allocation3], 1
    %13 = vsyncpa %s12, 0
    %14 = vsyncpa [#allocation6], 0
    %s15 = scalar_lea.sflag [#allocation6], 1
    %16 = vsyncpa %s15, 0
    %17 = vsyncpa [#allocation9], 0
    %18 = vsyncpa [#allocation12], 0
    %19 = vsyncpa [#allocation4], 0
    %s20 = scalar_lea.sflag [#allocation4], 1
    %21 = vsyncpa %s20, 0
    loop: start=0, step=1, limit=6
    $region2: #{tpu_custom_call.1} parent=1 // loop_pre_header
      _
    $region3: #{tpu_custom_call.1} parent=1 // loop_header
      %s23 = sphi 0, %s27
      %p24 = scmp.ge.s32.totalorder %s23, 6
      %s30 = sphi 0, %s42
      %s31 = sphi 0, %s38
      %s32 = sphi 0, %s30
      %s33 = sphi 0, %s31
      %s34 = sphi 0, %s32
      %s35 = sphi 0, %s33
      %s47 = sphi 0, %s49
      %s50 = sphi 0, %s47
      %s51 = sphi 0, %s50
      %s67 = sphi 0, %s51
      %s75 = sphi 0, %s77
      %s78 = sphi 0, %s75
      %s79 = sphi 0, %s78
      %s95 = sphi 0, %s79
      %s99 = sphi 0, %s99
      %s101 = sphi 0, %s99
      %s102 = sphi 0, %s101
      %s116 = sphi 0, %s102
      %s120 = sphi 0, %s120
      %s122 = sphi 0, %s120
      %s123 = sphi 0, %s122
      %s137 = sphi 0, %s123
      %s141 = sphi 0, %s141
      %s143 = sphi 0, %s141
      %s144 = sphi 0, %s143
      %s158 = sphi 0, %s144
      %s162 = sphi 0, %s162
      %s164 = sphi 0, %s162
      %s165 = sphi 0, %s164
      %s179 = sphi 0, %s165
      %s187 = sphi 0, %s189
      %s190 = sphi 0, %s187
      %s191 = sphi 0, %s190
      %s207 = sphi 0, %s191
    $region4: #{tpu_custom_call.1} parent=1 // loop_header_branch
      %26 = sbr.rel (%p24) target = $region8
    $region5: #{tpu_custom_call.1} parent=1 // loop_body
      %s28 = ssub.s32 %s23, 1
      %s29 = ssub.s32 %s23, 2
      %s36 = sadd.s32 1, %s31
      %p37 = scmp.ge.s32.totalorder %s36, 2
      %s38 = scalar_select %p37, 0, %s36
      %s39 = sadd.s32 1, %s30
      %s40 = scalar_select %p37, %s39, %s30
      %p41 = scmp.ge.s32.totalorder %s40, 2
      %s42 = scalar_select %p41, 0, %s40
      %s43 = ssub.s32 %s30, %s42
      %s44 = ssub.s32 %s31, %s38
      %s45 = sor.u32 %s43, %s44
      %p46 = scmp.eq.s32.totalorder %s45, 0
      %s48 = sadd.s32 %s47, 1
      %s49 = scalar_select %p46, %s47, %s48
      %p52 = pneg %p46
      %p53 = scmp.eq.s32.totalorder %s23, 3
      %p54 = por %p52, %p53
      %p55 = scmp.ne.s32.totalorder %s47, %s50
      %p56 = scmp.eq.s32.totalorder %s23, 0
      %p57 = por %p55, %p56
      %p58 = scmp.ne.s32.totalorder %s47, %s50
      %p59 = scmp.eq.s32.totalorder %s28, 3
      %p60 = por %p58, %p59
      %p61 = scmp.ne.s32.totalorder %s50, %s51
      %p62 = scmp.eq.s32.totalorder %s28, 0
      %p63 = por %p61, %p62
      %p64 = scmp.ne.s32.totalorder %s50, %s51
      %p65 = scmp.eq.s32.totalorder %s29, 3
      %p66 = por %p64, %p65
      %p68 = scmp.ne.s32.totalorder %s51, %s67
      %p69 = scmp.eq.s32.totalorder %s29, 0
      %p70 = por %p68, %p69
      %s71 = ssub.s32 %s30, %s42
      %s72 = ssub.s32 %s31, %s38
      %s73 = sor.u32 %s71, %s72
      %p74 = scmp.eq.s32.totalorder %s73, 0
      %s76 = sadd.s32 %s75, 1
      %s77 = scalar_select %p74, %s75, %s76
      %p80 = pneg %p74
      %p81 = scmp.eq.s32.totalorder %s23, 3
      %p82 = por %p80, %p81
      %p83 = scmp.ne.s32.totalorder %s75, %s78
      %p84 = scmp.eq.s32.totalorder %s23, 0
      %p85 = por %p83, %p84
      %p86 = scmp.ne.s32.totalorder %s75, %s78
      %p87 = scmp.eq.s32.totalorder %s28, 3
      %p88 = por %p86, %p87
      %p89 = scmp.ne.s32.totalorder %s78, %s79
      %p90 = scmp.eq.s32.totalorder %s28, 0
      %p91 = por %p89, %p90
      %p92 = scmp.ne.s32.totalorder %s78, %s79
      %p93 = scmp.eq.s32.totalorder %s29, 3
      %p94 = por %p92, %p93
      %p96 = scmp.ne.s32.totalorder %s79, %s95
      %p97 = scmp.eq.s32.totalorder %s29, 0
      %p98 = por %p96, %p97
      %s100 = sadd.s32 %s99, 1
      %p103 = scmp.eq.s32.totalorder %s23, 3
      %p104 = scmp.ne.s32.totalorder %s99, %s101
      %p105 = scmp.eq.s32.totalorder %s23, 0
      %p106 = por %p104, %p105
      %p107 = scmp.ne.s32.totalorder %s99, %s101
      %p108 = scmp.eq.s32.totalorder %s28, 3
      %p109 = por %p107, %p108
      %p110 = scmp.ne.s32.totalorder %s101, %s102
      %p111 = scmp.eq.s32.totalorder %s28, 0
      %p112 = por %p110, %p111
      %p113 = scmp.ne.s32.totalorder %s101, %s102
      %p114 = scmp.eq.s32.totalorder %s29, 3
      %p115 = por %p113, %p114
      %p117 = scmp.ne.s32.totalorder %s102, %s116
      %p118 = scmp.eq.s32.totalorder %s29, 0
      %p119 = por %p117, %p118
      %s121 = sadd.s32 %s120, 1
      %p124 = scmp.eq.s32.totalorder %s23, 3
      %p125 = scmp.ne.s32.totalorder %s120, %s122
      %p126 = scmp.eq.s32.totalorder %s23, 0
      %p127 = por %p125, %p126
      %p128 = scmp.ne.s32.totalorder %s120, %s122
      %p129 = scmp.eq.s32.totalorder %s28, 3
      %p130 = por %p128, %p129
      %p131 = scmp.ne.s32.totalorder %s122, %s123
      %p132 = scmp.eq.s32.totalorder %s28, 0
      %p133 = por %p131, %p132
      %p134 = scmp.ne.s32.totalorder %s122, %s123
      %p135 = scmp.eq.s32.totalorder %s29, 3
      %p136 = por %p134, %p135
      %p138 = scmp.ne.s32.totalorder %s123, %s137
      %p139 = scmp.eq.s32.totalorder %s29, 0
      %p140 = por %p138, %p139
      %s142 = sadd.s32 %s141, 1
      %p145 = scmp.eq.s32.totalorder %s23, 3
      %p146 = scmp.ne.s32.totalorder %s141, %s143
      %p147 = scmp.eq.s32.totalorder %s23, 0
      %p148 = por %p146, %p147
      %p149 = scmp.ne.s32.totalorder %s141, %s143
      %p150 = scmp.eq.s32.totalorder %s28, 3
      %p151 = por %p149, %p150
      %p152 = scmp.ne.s32.totalorder %s143, %s144
      %p153 = scmp.eq.s32.totalorder %s28, 0
      %p154 = por %p152, %p153
      %p155 = scmp.ne.s32.totalorder %s143, %s144
      %p156 = scmp.eq.s32.totalorder %s29, 3
      %p157 = por %p155, %p156
      %p159 = scmp.ne.s32.totalorder %s144, %s158
      %p160 = scmp.eq.s32.totalorder %s29, 0
      %p161 = por %p159, %p160
      %s163 = sadd.s32 %s162, 1
      %p166 = scmp.eq.s32.totalorder %s23, 3
      %p167 = scmp.ne.s32.totalorder %s162, %s164
      %p168 = scmp.eq.s32.totalorder %s23, 0
      %p169 = por %p167, %p168
      %p170 = scmp.ne.s32.totalorder %s162, %s164
      %p171 = scmp.eq.s32.totalorder %s28, 3
      %p172 = por %p170, %p171
      %p173 = scmp.ne.s32.totalorder %s164, %s165
      %p174 = scmp.eq.s32.totalorder %s28, 0
      %p175 = por %p173, %p174
      %p176 = scmp.ne.s32.totalorder %s164, %s165
      %p177 = scmp.eq.s32.totalorder %s29, 3
      %p178 = por %p176, %p177
      %p180 = scmp.ne.s32.totalorder %s165, %s179
      %p181 = scmp.eq.s32.totalorder %s29, 0
      %p182 = por %p180, %p181
      %s183 = ssub.s32 %s30, %s42
      %s184 = ssub.s32 %s31, %s38
      %s185 = sor.u32 %s183, %s184
      %p186 = scmp.eq.s32.totalorder %s185, 0
      %s188 = sadd.s32 %s187, 1
      %s189 = scalar_select %p186, %s187, %s188
      %p192 = pneg %p186
      %p193 = scmp.eq.s32.totalorder %s23, 3
      %p194 = por %p192, %p193
      %p195 = scmp.ne.s32.totalorder %s187, %s190
      %p196 = scmp.eq.s32.totalorder %s23, 0
      %p197 = por %p195, %p196
      %p198 = scmp.ne.s32.totalorder %s187, %s190
      %p199 = scmp.eq.s32.totalorder %s28, 3
      %p200 = por %p198, %p199
      %p201 = scmp.ne.s32.totalorder %s190, %s191
      %p202 = scmp.eq.s32.totalorder %s28, 0
      %p203 = por %p201, %p202
      %p204 = scmp.ne.s32.totalorder %s190, %s191
      %p205 = scmp.eq.s32.totalorder %s29, 3
      %p206 = por %p204, %p205
      %p208 = scmp.ne.s32.totalorder %s191, %s207
      %p209 = scmp.eq.s32.totalorder %s29, 0
      %p210 = por %p208, %p209
      %p211 = scmp.le.s32.totalorder 1, %s23
      %p212 = scmp.lt.s32.totalorder %s23, 5
      %p213 = pnand %p211, %p212
      %p214 = pneg %p213
      // Predicated region
      $region9: #{tpu_custom_call.1} parent=5 // pred_check
        _
      $region10: #{tpu_custom_call.1} parent=5 // pred_check_branch
        %216 = sbr.rel (%p213) target = $region12
      $region11: #{tpu_custom_call.1} parent=5 // pred_region
        %s217 = ssub.s32 %s23, 1
        // Predicated region
        $region13: #{tpu_custom_call.1} parent=11 // pred_check
          %p218 = pneg %p112
        $region14: #{tpu_custom_call.1} parent=11 // pred_check_branch
          %220 = sbr.rel (%p218) target = $region16
        $region15: #{tpu_custom_call.1} parent=11 // pred_region
          %222 = vsyncadd [#allocation6], 0
          %s223 = sshll.u32 %s2, 4
          %s224 = int_to_ptr.hbm [resolvable:$true] %s223
          %s225 = sshll.u32 [#allocation7], 4
          %s226 = int_to_ptr.vmem [resolvable:$true] %s225
          %231 = dma.hbm_to_vmem [thread:$0]  %s224, 1024, %s226, [#allocation6], 64, 64, 4
        $region16: #{tpu_custom_call.1} parent=11 // pred_fallthru
          _
        // Predicated region
        $region17: #{tpu_custom_call.1} parent=11 // pred_check
          %p232 = pneg %p133
        $region18: #{tpu_custom_call.1} parent=11 // pred_check_branch
          %234 = sbr.rel (%p232) target = $region20
        $region19: #{tpu_custom_call.1} parent=11 // pred_region
          %236 = vsyncadd [#allocation9], 0
          %s237 = sshll.u32 %s3, 4
          %s238 = int_to_ptr.hbm [resolvable:$true] %s237
          %s239 = sshll.u32 [#allocation8], 4
          %s240 = int_to_ptr.vmem [resolvable:$true] %s239
          %245 = dma.hbm_to_vmem [thread:$0]  %s238, 1024, %s240, [#allocation9], 64, 64, 4
        $region20: #{tpu_custom_call.1} parent=11 // pred_fallthru
          _
        // Predicated region
        $region21: #{tpu_custom_call.1} parent=11 // pred_check
          %p246 = pneg %p154
        $region22: #{tpu_custom_call.1} parent=11 // pred_check_branch
          %248 = sbr.rel (%p246) target = $region24
        $region23: #{tpu_custom_call.1} parent=11 // pred_region
          %250 = vsyncadd [#allocation9], 0
          %s251 = sshll.u32 %s4, 4
          %s252 = int_to_ptr.hbm [resolvable:$true] %s251
          %s253 = sshll.u32 [#allocation10], 4
          %s254 = int_to_ptr.vmem [resolvable:$true] %s253
          %259 = dma.hbm_to_vmem [thread:$0]  %s252, 1024, %s254, [#allocation9], 64, 64, 4
        $region24: #{tpu_custom_call.1} parent=11 // pred_fallthru
          _
        // Predicated region
        $region25: #{tpu_custom_call.1} parent=11 // pred_check
          %p260 = pneg %p175
        $region26: #{tpu_custom_call.1} parent=11 // pred_check_branch
          %262 = sbr.rel (%p260) target = $region28
        $region27: #{tpu_custom_call.1} parent=11 // pred_region
          %264 = vsyncadd [#allocation12], 0
          %s266 = sshll.u32 %s5, 4
          %s267 = int_to_ptr.hbm [resolvable:$true] %s266
          %s268 = sshll.u32 [#allocation11], 4
          %s269 = int_to_ptr.vmem [resolvable:$true] %s268
          %271 = dma.hbm_to_vmem [thread:$0]  %s267, 128, %s269, [#allocation12]
        $region28: #{tpu_custom_call.1} parent=11 // pred_fallthru
          _
      $region12: #{tpu_custom_call.1} parent=5 // pred_fallthru
        _
      %p272 = scmp.lt.s32.totalorder %s23, 4
      // Predicated region
      $region29: #{tpu_custom_call.1} parent=5 // pred_check
        %p273 = pneg %p272
      $region30: #{tpu_custom_call.1} parent=5 // pred_check_branch
        %275 = sbr.rel (%p273) target = $region32
      $region31: #{tpu_custom_call.1} parent=5 // pred_region
        // Predicated region
        $region33: #{tpu_custom_call.1} parent=31 // pred_check
          %p276 = pneg %p57
        $region34: #{tpu_custom_call.1} parent=31 // pred_check_branch
          %278 = sbr.rel (%p276) target = $region36
        $region35: #{tpu_custom_call.1} parent=31 // pred_region
          %s279 = sand.u32 %s47, 1
          %s280 = scalar_lea.sflag [#allocation3], %s279
          %s281 = sand.u32 %s47, 1
          %s282 = smul.addr %s281, 16
          %s283 = scalar_lea.vmem [#allocation2], %s282
          %s284 = smul.u32 4, %s31
          %286 = vsyncadd %s280, 0
          %s287 = smul.addr %s30, 8
          %s288 = sadd.s32 %s284, %s287
          %s289 = smul.addr %s288, 4
          %s290 = scalar_lea.hbm %s0, %s289
          %s291 = sshll.u32 %s290, 4
          %s292 = int_to_ptr.hbm [resolvable:$true] %s291
          %s293 = sshll.u32 %s283, 4
          %s294 = int_to_ptr.vmem [resolvable:$true] %s293
          %299 = dma.hbm_to_vmem [thread:$0]  %s292, 256, %s294, %s280, 64, 64, 4
        $region36: #{tpu_custom_call.1} parent=31 // pred_fallthru
          _
        // Predicated region
        $region37: #{tpu_custom_call.1} parent=31 // pred_check
          %p300 = pneg %p85
        $region38: #{tpu_custom_call.1} parent=31 // pred_check_branch
          %302 = sbr.rel (%p300) target = $region40
        $region39: #{tpu_custom_call.1} parent=31 // pred_region
          %s303 = sand.u32 %s23, 1
          %s304 = scalar_lea.sflag [#allocation6], %s303
          %s305 = sand.u32 %s75, 1
          %s306 = smul.addr %s305, 4
          %s307 = scalar_lea.vmem [#allocation5], %s306
          %309 = vsyncadd %s304, 0
          %s310 = smul.addr %s30, 2
          %s311 = sadd.s32 %s31, %s310
          %s312 = smul.addr %s311, 4
          %s313 = scalar_lea.hbm %s1, %s312
          %s315 = sshll.u32 %s313, 4
          %s316 = int_to_ptr.hbm [resolvable:$true] %s315
          %s317 = sshll.u32 %s307, 4
          %s318 = int_to_ptr.vmem [resolvable:$true] %s317
          %320 = dma.hbm_to_vmem [thread:$0]  %s316, 64, %s318, %s304
        $region40: #{tpu_custom_call.1} parent=31 // pred_fallthru
          _
      $region32: #{tpu_custom_call.1} parent=5 // pred_fallthru
        _
      %p321 = scmp.le.s32.totalorder 1, %s23
      %p322 = scmp.lt.s32.totalorder %s23, 5
      %p323 = pnand %p321, %p322
      %p324 = pneg %p323
      // Predicated region
      $region41: #{tpu_custom_call.1} parent=5 // pred_check
        _
      $region42: #{tpu_custom_call.1} parent=5 // pred_check_branch
        %326 = sbr.rel (%p323) target = $region44
      $region43: #{tpu_custom_call.1} parent=5 // pred_region
        %s327 = ssub.s32 %s23, 1
        %s328 = sand.u32 %s50, 1
        %s329 = scalar_lea.sflag [#allocation3], %s328
        %s330 = sand.u32 %s50, 1
        %s331 = smul.addr %s330, 16
        %s332 = scalar_lea.vmem [#allocation2], %s331
        // Predicated region
        $region45: #{tpu_custom_call.1} parent=43 // pred_check
          %p333 = pneg %p63
        $region46: #{tpu_custom_call.1} parent=43 // pred_check_branch
          %335 = sbr.rel (%p333) target = $region48
        $region47: #{tpu_custom_call.1} parent=43 // pred_region
          %337 = dma.done %s329, 256
        $region48: #{tpu_custom_call.1} parent=43 // pred_fallthru
          _
        %s338 = sand.u32 %s28, 1
        %s339 = scalar_lea.sflag [#allocation6], %s338
        %s340 = sand.u32 %s78, 1
        %s341 = smul.addr %s340, 4
        %s342 = scalar_lea.vmem [#allocation5], %s341
        // Predicated region
        $region49: #{tpu_custom_call.1} parent=43 // pred_check
          %p343 = pneg %p91
        $region50: #{tpu_custom_call.1} parent=43 // pred_check_branch
          %345 = sbr.rel (%p343) target = $region52
        $region51: #{tpu_custom_call.1} parent=43 // pred_region
          %347 = dma.done %s339, 64
        $region52: #{tpu_custom_call.1} parent=43 // pred_fallthru
          _
        // Predicated region
        $region53: #{tpu_custom_call.1} parent=43 // pred_check
          %p348 = pneg %p112
        $region54: #{tpu_custom_call.1} parent=43 // pred_check_branch
          %350 = sbr.rel (%p348) target = $region56
        $region55: #{tpu_custom_call.1} parent=43 // pred_region
          %352 = dma.done [#allocation6], 1024
        $region56: #{tpu_custom_call.1} parent=43 // pred_fallthru
          _
        // Predicated region
        $region57: #{tpu_custom_call.1} parent=43 // pred_check
          %p353 = pneg %p133
        $region58: #{tpu_custom_call.1} parent=43 // pred_check_branch
          %355 = sbr.rel (%p353) target = $region60
        $region59: #{tpu_custom_call.1} parent=43 // pred_region
          %357 = dma.done [#allocation9], 1024
        $region60: #{tpu_custom_call.1} parent=43 // pred_fallthru
          _
        // Predicated region
        $region61: #{tpu_custom_call.1} parent=43 // pred_check
          %p358 = pneg %p154
        $region62: #{tpu_custom_call.1} parent=43 // pred_check_branch
          %360 = sbr.rel (%p358) target = $region64
        $region63: #{tpu_custom_call.1} parent=43 // pred_region
          %362 = dma.done [#allocation9], 1024
        $region64: #{tpu_custom_call.1} parent=43 // pred_fallthru
          _
        // Predicated region
        $region65: #{tpu_custom_call.1} parent=43 // pred_check
          %p363 = pneg %p175
        $region66: #{tpu_custom_call.1} parent=43 // pred_check_branch
          %365 = sbr.rel (%p363) target = $region68
        $region67: #{tpu_custom_call.1} parent=43 // pred_region
          %367 = dma.done [#allocation12], 128
        $region68: #{tpu_custom_call.1} parent=43 // pred_fallthru
          _
        %s368 = sand.u32 %s50, 1
        %s369 = scalar_lea.sflag [#allocation3], %s368
        %s370 = sand.u32 %s50, 1
        %s371 = smul.addr %s370, 16
        %s372 = scalar_lea.vmem [#allocation2], %s371
        %p373 = pneg %p63
        %p374 = pneg %p60
        %s375 = sand.u32 %s28, 1
        %s376 = scalar_lea.sflag [#allocation6], %s375
        %s377 = sand.u32 %s78, 1
        %s378 = smul.addr %s377, 4
        %s379 = scalar_lea.vmem [#allocation5], %s378
        %p380 = pneg %p91
        %p381 = pneg %p88
        %p382 = pneg %p112
        %p383 = pneg %p109
        %p384 = pneg %p133
        %p385 = pneg %p130
        %p386 = pneg %p154
        %p387 = pneg %p151
        %p388 = pneg %p175
        %p389 = pneg %p172
        %p390 = pneg %p203
        %p391 = pneg %p200
        %s392 = sand.u32 %s190, 1
        %s393 = scalar_lea.sflag [#allocation4], %s392
        %s394 = sand.u32 %s190, 1
        %s395 = smul.addr %s394, 16
        %s396 = scalar_lea.vmem [#allocation13], %s395
        %s397 = smul.u32 4, %s33
        %s398 = smul.u32 4, %s33
        %v399 = vld [vmem:[#allocation11] sm:$0xff]
        %v400 = vld [vmem:[%s332] sm:$0xf]
        %v401 = vld [vmem:[%s332 + $0x4] sm:$0xf]
        %v402 = vld [vmem:[%s332 + $0x8] sm:$0xf]
        %v403 = vld [vmem:[%s332 + $0xc] sm:$0xf]
        %v404 = vld [vmem:[%s342] sm:$0xf]
        %v409 = vunpack.c.l.b16 %v400
        %v410 = vunpack.c.l.b16 %v401
        %v411 = vunpack.c.l.b16 %v402
        %v412 = vunpack.c.l.b16 %v403
        %v413 = vpack.c.b16 %v410, %v409
        %v414 = vpack.c.b16 %v412, %v411
        %v417 = vunpack.c.l.bf16 %v413
        %v418 = vunpack.c.h.bf16 %v413
        %v419 = vunpack.c.l.bf16 %v414
        %v420 = vunpack.c.h.bf16 %v414
        %v421 = vunpack.c.l.bf16 %v404
        %422 = vadd.xlane.f32.xlu0 %v417
        %v423 = vpop.xlane.xlu0 %422
        %424 = vadd.xlane.f32.xlu0 %v418
        %v425 = vpop.xlane.xlu0 %424
        %426 = vadd.xlane.f32.xlu0 %v419
        %v427 = vpop.xlane.xlu0 %426
        %428 = vadd.xlane.f32.xlu0 %v420
        %v429 = vpop.xlane.xlu0 %428
        %430 = vadd.xlane.f32.xlu0 %v421
        %v431 = vpop.xlane.xlu0 %430
        %v432 = vrcp.pop 128.0
        %v433 = vmul.f32 128.0, %v432
        %v434 = vsub.f32 1.0, %v433
        %v435 = vmul.f32 %v432, %v434
        %v436 = vadd.f32 %v432, %v435
        %vm437 = vweird.f32 %v432
        %v438 = vsel %vm437, %v432, %v436
        %v439 = vmul.f32 %v423, %v438
        %v440 = vmul.f32 %v425, %v438
        %v441 = vmul.f32 %v427, %v438
        %v442 = vmul.f32 %v429, %v438
        %v443 = vmul.f32 %v431, %v438
        %v444 = vsub.f32 %v417, %v439
        %v445 = vsub.f32 %v418, %v440
        %v446 = vsub.f32 %v419, %v441
        %v447 = vsub.f32 %v420, %v442
        %v448 = vsub.f32 %v421, %v443
        %v449 = vmul.f32 %v444, %v444
        %v450 = vmul.f32 %v445, %v445
        %v451 = vmul.f32 %v446, %v446
        %v452 = vmul.f32 %v447, %v447
        %v453 = vmul.f32 %v448, %v448
        %454 = vadd.xlane.f32.xlu0 %v449
        %v455 = vpop.xlane.xlu0 %454
        %456 = vadd.xlane.f32.xlu0 %v450
        %v457 = vpop.xlane.xlu0 %456
        %458 = vadd.xlane.f32.xlu0 %v451
        %v459 = vpop.xlane.xlu0 %458
        %460 = vadd.xlane.f32.xlu0 %v452
        %v461 = vpop.xlane.xlu0 %460
        %462 = vadd.xlane.f32.xlu0 %v453
        %v463 = vpop.xlane.xlu0 %462
        %v464 = vmul.f32 %v455, %v438
        %v465 = vmul.f32 %v457, %v438
        %v466 = vmul.f32 %v459, %v438
        %v467 = vmul.f32 %v461, %v438
        %v468 = vmul.f32 %v463, %v438
        %v469 = vadd.f32 %v464, 1e-05
        %v470 = vadd.f32 %v465, 1e-05
        %v471 = vadd.f32 %v466, 1e-05
        %v472 = vadd.f32 %v467, 1e-05
        %v473 = vadd.f32 %v468, 1e-05
        %v474 = vrsqrt.pop %v469
        %v475 = vmul.f32 %v474, %v469
        %v476 = vmul.f32 %v475, %v474
        %v477 = vmul.f32 0.5, %v476
        %v478 = vsub.f32 1.5, %v477
        %v479 = vmul.f32 %v474, %v478
        %vm480 = vweird.f32 %v469
        %vm481 = vweird.f32 %v474
        %vm482 = vmor %vm480, %vm481
        %v483 = vsel %vm482, %v474, %v479
        %v484 = vrsqrt.pop %v470
        %v485 = vmul.f32 %v484, %v470
        %v486 = vmul.f32 %v485, %v484
        %v487 = vmul.f32 0.5, %v486
        %v488 = vsub.f32 1.5, %v487
        %v489 = vmul.f32 %v484, %v488
        %vm490 = vweird.f32 %v470
        %vm491 = vweird.f32 %v484
        %vm492 = vmor %vm490, %vm491
        %v493 = vsel %vm492, %v484, %v489
        %v494 = vrsqrt.pop %v471
        %v495 = vmul.f32 %v494, %v471
        %v496 = vmul.f32 %v495, %v494
        %v497 = vmul.f32 0.5, %v496
        %v498 = vsub.f32 1.5, %v497
        %v499 = vmul.f32 %v494, %v498
        %vm500 = vweird.f32 %v471
        %vm501 = vweird.f32 %v494
        %vm502 = vmor %vm500, %vm501
        %v503 = vsel %vm502, %v494, %v499
        %v504 = vrsqrt.pop %v472
        %v505 = vmul.f32 %v504, %v472
        %v506 = vmul.f32 %v505, %v504
        %v507 = vmul.f32 0.5, %v506
        %v508 = vsub.f32 1.5, %v507
        %v509 = vmul.f32 %v504, %v508
        %vm510 = vweird.f32 %v472
        %vm511 = vweird.f32 %v504
        %vm512 = vmor %vm510, %vm511
        %v513 = vsel %vm512, %v504, %v509
        %v514 = vrsqrt.pop %v473
        %v515 = vmul.f32 %v514, %v473
        %v516 = vmul.f32 %v515, %v514
        %v517 = vmul.f32 0.5, %v516
        %v518 = vsub.f32 1.5, %v517
        %v519 = vmul.f32 %v514, %v518
        %vm520 = vweird.f32 %v473
        %vm521 = vweird.f32 %v514
        %vm522 = vmor %vm520, %vm521
        %v523 = vsel %vm522, %v514, %v519
        %v524 = vmul.f32 %v444, %v483
        %v525 = vmul.f32 %v445, %v493
        %v526 = vmul.f32 %v446, %v503
        %v527 = vmul.f32 %v447, %v513
        %v528 = vmul.f32 %v448, %v523
        %v529 = vpack.c.bf16 %v525, %v524
        %v530 = vpack.c.bf16 %v527, %v526
        %v531 = vpack.c.bf16 %v528, %v528
        %v532 = vld [vmem:[#allocation7] sm:$0xf]
        %v533 = vld [vmem:[#allocation7 + $0x4] sm:$0xf]
        %v534 = vld [vmem:[#allocation7 + $0x8] sm:$0xf]
        %v535 = vld [vmem:[#allocation7 + $0xc] sm:$0xf]
        %v536 = vld [vmem:[#allocation7 + $0x10] sm:$0xf]
        %v537 = vld [vmem:[#allocation7 + $0x14] sm:$0xf]
        %v538 = vld [vmem:[#allocation7 + $0x18] sm:$0xf]
        %v539 = vld [vmem:[#allocation7 + $0x1c] sm:$0xf]
        %v540 = vld [vmem:[#allocation7 + $0x20] sm:$0xf]
        %v541 = vld [vmem:[#allocation7 + $0x24] sm:$0xf]
        %v542 = vld [vmem:[#allocation7 + $0x28] sm:$0xf]
        %v543 = vld [vmem:[#allocation7 + $0x2c] sm:$0xf]
        %v544 = vld [vmem:[#allocation7 + $0x30] sm:$0xf]
        %v545 = vld [vmem:[#allocation7 + $0x34] sm:$0xf]
        %v546 = vld [vmem:[#allocation7 + $0x38] sm:$0xf]
        %v547 = vld [vmem:[#allocation7 + $0x3c] sm:$0xf]
        %v548 = vperm.slane %v399, 0
        %v565 = vunpack.c.l.b16 %v532
        %v566 = vunpack.c.l.b16 %v533
        %v567 = vunpack.c.l.b16 %v534
        %v568 = vunpack.c.l.b16 %v535
        %v569 = vunpack.c.l.b16 %v536
        %v570 = vunpack.c.l.b16 %v537
        %v571 = vunpack.c.l.b16 %v538
        %v572 = vunpack.c.l.b16 %v539
        %v573 = vunpack.c.l.b16 %v540
        %v574 = vunpack.c.l.b16 %v541
        %v575 = vunpack.c.l.b16 %v542
        %v576 = vunpack.c.l.b16 %v543
        %v577 = vunpack.c.l.b16 %v544
        %v578 = vunpack.c.l.b16 %v545
        %v579 = vunpack.c.l.b16 %v546
        %v580 = vunpack.c.l.b16 %v547
        %v581 = vpack.c.b16 %v566, %v565
        %v582 = vpack.c.b16 %v568, %v567
        %v583 = vpack.c.b16 %v570, %v569
        %v584 = vpack.c.b16 %v572, %v571
        %v585 = vpack.c.b16 %v574, %v573
        %v586 = vpack.c.b16 %v576, %v575
        %v587 = vpack.c.b16 %v578, %v577
        %v588 = vpack.c.b16 %v580, %v579
        %597 = vmatpush.bf16.msra.mxu0 %v588
        %598 = vmatpush.bf16.msra.mxu0 %v587
        %599 = vmatpush.bf16.msra.mxu0 %v586
        %600 = vmatpush.bf16.msra.mxu0 %v585
        %601 = vmatpush.bf16.msra.mxu0 %v584
        %602 = vmatpush.bf16.msra.mxu0 %v583
        %603 = vmatpush.bf16.msra.mxu0 %v582
        %604 = vmatpush.bf16.msra.mxu0 %v581
        %605 = vmatmul.bf16.gmra.mxu0 %v529
        %v606 = vpop.f32.mrf.mxu0
        %v607 = vadd.f32 %v548, %v606
        %v608 = vpop.f32.mrf.mxu0
        %v609 = vadd.f32 %v548, %v608
        %610 = vmatmul.bf16.gmra.mxu0 %v530
        %v611 = vpop.f32.mrf.mxu0
        %v612 = vadd.f32 %v548, %v611
        %v613 = vpop.f32.mrf.mxu0
        %v614 = vadd.f32 %v548, %v613
        %615 = vmatmul.bf16.gmra.mxu0 %v531
        %v616 = vpop.f32.mrf.mxu0
        %v617 = vadd.f32 %v548, %v616
        %v618 = vpop.f32.mrf.mxu0
        %619 = vdwg.mxu0
        %v620 = vld [vmem:[#allocation8] sm:$0xf]
        %v621 = vld [vmem:[#allocation8 + $0x4] sm:$0xf]
        %v622 = vld [vmem:[#allocation8 + $0x8] sm:$0xf]
        %v623 = vld [vmem:[#allocation8 + $0xc] sm:$0xf]
        %v624 = vld [vmem:[#allocation8 + $0x10] sm:$0xf]
        %v625 = vld [vmem:[#allocation8 + $0x14] sm:$0xf]
        %v626 = vld [vmem:[#allocation8 + $0x18] sm:$0xf]
        %v627 = vld [vmem:[#allocation8 + $0x1c] sm:$0xf]
        %v628 = vld [vmem:[#allocation8 + $0x20] sm:$0xf]
        %v629 = vld [vmem:[#allocation8 + $0x24] sm:$0xf]
        %v630 = vld [vmem:[#allocation8 + $0x28] sm:$0xf]
        %v631 = vld [vmem:[#allocation8 + $0x2c] sm:$0xf]
        %v632 = vld [vmem:[#allocation8 + $0x30] sm:$0xf]
        %v633 = vld [vmem:[#allocation8 + $0x34] sm:$0xf]
        %v634 = vld [vmem:[#allocation8 + $0x38] sm:$0xf]
        %v635 = vld [vmem:[#allocation8 + $0x3c] sm:$0xf]
        %v636 = vperm.slane %v399, 1
        %v653 = vunpack.c.l.b16 %v620
        %v654 = vunpack.c.l.b16 %v621
        %v655 = vunpack.c.l.b16 %v622
        %v656 = vunpack.c.l.b16 %v623
        %v657 = vunpack.c.l.b16 %v624
        %v658 = vunpack.c.l.b16 %v625
        %v659 = vunpack.c.l.b16 %v626
        %v660 = vunpack.c.l.b16 %v627
        %v661 = vunpack.c.l.b16 %v628
        %v662 = vunpack.c.l.b16 %v629
        %v663 = vunpack.c.l.b16 %v630
        %v664 = vunpack.c.l.b16 %v631
        %v665 = vunpack.c.l.b16 %v632
        %v666 = vunpack.c.l.b16 %v633
        %v667 = vunpack.c.l.b16 %v634
        %v668 = vunpack.c.l.b16 %v635
        %v669 = vpack.c.b16 %v654, %v653
        %v670 = vpack.c.b16 %v656, %v655
        %v671 = vpack.c.b16 %v658, %v657
        %v672 = vpack.c.b16 %v660, %v659
        %v673 = vpack.c.b16 %v662, %v661
        %v674 = vpack.c.b16 %v664, %v663
        %v675 = vpack.c.b16 %v666, %v665
        %v676 = vpack.c.b16 %v668, %v667
        %685 = vmatpush.bf16.msra.mxu0 %v676
        %686 = vmatpush.bf16.msra.mxu0 %v675
        %687 = vmatpush.bf16.msra.mxu0 %v674
        %688 = vmatpush.bf16.msra.mxu0 %v673
        %689 = vmatpush.bf16.msra.mxu0 %v672
        %690 = vmatpush.bf16.msra.mxu0 %v671
        %691 = vmatpush.bf16.msra.mxu0 %v670
        %692 = vmatpush.bf16.msra.mxu0 %v669
        %693 = vmatmul.bf16.gmra.mxu0 %v529
        %v694 = vpop.f32.mrf.mxu0
        %v695 = vadd.f32 %v636, %v694
        %v696 = vpop.f32.mrf.mxu0
        %v697 = vadd.f32 %v636, %v696
        %698 = vmatmul.bf16.gmra.mxu0 %v530
        %v699 = vpop.f32.mrf.mxu0
        %v700 = vadd.f32 %v636, %v699
        %v701 = vpop.f32.mrf.mxu0
        %v702 = vadd.f32 %v636, %v701
        %703 = vmatmul.bf16.gmra.mxu0 %v531
        %v704 = vpop.f32.mrf.mxu0
        %v705 = vadd.f32 %v636, %v704
        %v706 = vpop.f32.mrf.mxu0
        %707 = vdwg.mxu0
        %v708 = vmul.f32 %v695, 0.5
        %v709 = vmul.f32 %v697, 0.5
        %v710 = vmul.f32 %v700, 0.5
        %v711 = vmul.f32 %v702, 0.5
        %v712 = vmul.f32 %v705, 0.5
        %v713 = vtanh.pop %v708
        %v714 = vtanh.pop %v709
        %v715 = vtanh.pop %v710
        %v716 = vtanh.pop %v711
        %v717 = vtanh.pop %v712
        %v718 = vadd.f32 %v713, 1.0
        %v719 = vadd.f32 %v714, 1.0
        %v720 = vadd.f32 %v715, 1.0
        %v721 = vadd.f32 %v716, 1.0
        %v722 = vadd.f32 %v717, 1.0
        %v723 = vmul.f32 %v718, 0.5
        %v724 = vmul.f32 %v719, 0.5
        %v725 = vmul.f32 %v720, 0.5
        %v726 = vmul.f32 %v721, 0.5
        %v727 = vmul.f32 %v722, 0.5
        %v728 = vmul.f32 %v607, %v723
        %v729 = vmul.f32 %v609, %v724
        %v730 = vmul.f32 %v612, %v725
        %v731 = vmul.f32 %v614, %v726
        %v732 = vmul.f32 %v617, %v727
        %p733 = scmp.gt.s32.totalorder %s33, 0
        %s734 = scalar_select %p733, 1, 0
        %s735 = scvt.s32.f32 %s734
        %s736 = sadd.s32 %s33, 1
        %s737 = smul.u32 %s736, 32
        %p738 = scmp.lt.s32.totalorder %s737, 64
        %s739 = scalar_select %p738, 1, 0
        %s740 = scvt.s32.f32 %s739
        %v741 = vstv %s735
        %v742 = vmul.f32 %v732, %v741
        %v743 = vstv %s740
        %v744 = vmul.f32 %v732, %v743
        %vm749 = vcmask 1040384
        %v750 = vrot.slane %v728, 7
        %v751 = vrot.slane %v729, 7
        %v752 = vsel %vm749, %v750, %v751
        %v753 = vrot.slane %v730, 7
        %v754 = vsel %vm749, %v751, %v753
        %v755 = vrot.slane %v731, 7
        %v756 = vsel %vm749, %v753, %v755
        %v761 = vsel %vm749, %v742, %v750
        %vm762 = vcmask 1046528
        %v763 = vrot.slane %v728, 1
        %v764 = vrot.slane %v729, 1
        %v765 = vsel %vm762, %v763, %v764
        %v766 = vrot.slane %v730, 1
        %v767 = vsel %vm762, %v764, %v766
        %v768 = vrot.slane %v731, 1
        %v769 = vsel %vm762, %v766, %v768
        %v775 = vrot.slane %v744, 2
        %v777 = vsel %vm762, %v768, %v775
        %v778 = vperm.slane %v399, 2
        %v779 = vmul.f32 %v761, %v778
        %v780 = vmul.f32 %v752, %v778
        %v781 = vmul.f32 %v754, %v778
        %v782 = vmul.f32 %v756, %v778
        %v783 = vperm.slane %v399, 3
        %v784 = vmul.f32 %v728, %v783
        %v785 = vmul.f32 %v729, %v783
        %v786 = vmul.f32 %v730, %v783
        %v787 = vmul.f32 %v731, %v783
        %v788 = vadd.f32 %v779, %v784
        %v789 = vadd.f32 %v780, %v785
        %v790 = vadd.f32 %v781, %v786
        %v791 = vadd.f32 %v782, %v787
        %v792 = vperm.slane %v399, 4
        %v793 = vmul.f32 %v765, %v792
        %v794 = vmul.f32 %v767, %v792
        %v795 = vmul.f32 %v769, %v792
        %v796 = vmul.f32 %v777, %v792
        %v797 = vadd.f32 %v788, %v793
        %v798 = vadd.f32 %v789, %v794
        %v799 = vadd.f32 %v790, %v795
        %v800 = vadd.f32 %v791, %v796
        %v801 = vperm.slane %v399, 5
        %v802 = vadd.f32 %v797, %v801
        %v803 = vadd.f32 %v798, %v801
        %v804 = vadd.f32 %v799, %v801
        %v805 = vadd.f32 %v800, %v801
        %v806 = vmul.f32 %v802, 0.5
        %v807 = vmul.f32 %v803, 0.5
        %v808 = vmul.f32 %v804, 0.5
        %v809 = vmul.f32 %v805, 0.5
        %v810 = vtanh.pop %v806
        %v811 = vtanh.pop %v807
        %v812 = vtanh.pop %v808
        %v813 = vtanh.pop %v809
        %v814 = vadd.f32 %v810, 1.0
        %v815 = vadd.f32 %v811, 1.0
        %v816 = vadd.f32 %v812, 1.0
        %v817 = vadd.f32 %v813, 1.0
        %v818 = vmul.f32 %v814, 0.5
        %v819 = vmul.f32 %v815, 0.5
        %v820 = vmul.f32 %v816, 0.5
        %v821 = vmul.f32 %v817, 0.5
        %v822 = vmul.f32 %v802, %v818
        %v823 = vmul.f32 %v803, %v819
        %v824 = vmul.f32 %v804, %v820
        %v825 = vmul.f32 %v805, %v821
        %v826 = vpack.c.bf16 %v823, %v822
        %v827 = vpack.c.bf16 %v825, %v824
        %v828 = vld [vmem:[#allocation10] sm:$0xf]
        %v829 = vld [vmem:[#allocation10 + $0x4] sm:$0xf]
        %v830 = vld [vmem:[#allocation10 + $0x8] sm:$0xf]
        %v831 = vld [vmem:[#allocation10 + $0xc] sm:$0xf]
        %v832 = vld [vmem:[#allocation10 + $0x10] sm:$0xf]
        %v833 = vld [vmem:[#allocation10 + $0x14] sm:$0xf]
        %v834 = vld [vmem:[#allocation10 + $0x18] sm:$0xf]
        %v835 = vld [vmem:[#allocation10 + $0x1c] sm:$0xf]
        %v836 = vld [vmem:[#allocation10 + $0x20] sm:$0xf]
        %v837 = vld [vmem:[#allocation10 + $0x24] sm:$0xf]
        %v838 = vld [vmem:[#allocation10 + $0x28] sm:$0xf]
        %v839 = vld [vmem:[#allocation10 + $0x2c] sm:$0xf]
        %v840 = vld [vmem:[#allocation10 + $0x30] sm:$0xf]
        %v841 = vld [vmem:[#allocation10 + $0x34] sm:$0xf]
        %v842 = vld [vmem:[#allocation10 + $0x38] sm:$0xf]
        %v843 = vld [vmem:[#allocation10 + $0x3c] sm:$0xf]
        %v844 = vperm.slane %v399, 6
        %v861 = vunpack.c.l.b16 %v828
        %v862 = vunpack.c.l.b16 %v829
        %v863 = vunpack.c.l.b16 %v830
        %v864 = vunpack.c.l.b16 %v831
        %v865 = vunpack.c.l.b16 %v832
        %v866 = vunpack.c.l.b16 %v833
        %v867 = vunpack.c.l.b16 %v834
        %v868 = vunpack.c.l.b16 %v835
        %v869 = vunpack.c.l.b16 %v836
        %v870 = vunpack.c.l.b16 %v837
        %v871 = vunpack.c.l.b16 %v838
        %v872 = vunpack.c.l.b16 %v839
        %v873 = vunpack.c.l.b16 %v840
        %v874 = vunpack.c.l.b16 %v841
        %v875 = vunpack.c.l.b16 %v842
        %v876 = vunpack.c.l.b16 %v843
        %v877 = vpack.c.b16 %v862, %v861
        %v878 = vpack.c.b16 %v864, %v863
        %v879 = vpack.c.b16 %v866, %v865
        %v880 = vpack.c.b16 %v868, %v867
        %v881 = vpack.c.b16 %v870, %v869
        %v882 = vpack.c.b16 %v872, %v871
        %v883 = vpack.c.b16 %v874, %v873
        %v884 = vpack.c.b16 %v876, %v875
        %893 = vmatpush.bf16.msra.mxu0 %v884
        %894 = vmatpush.bf16.msra.mxu0 %v883
        %895 = vmatpush.bf16.msra.mxu0 %v882
        %896 = vmatpush.bf16.msra.mxu0 %v881
        %897 = vmatpush.bf16.msra.mxu0 %v880
        %898 = vmatpush.bf16.msra.mxu0 %v879
        %899 = vmatpush.bf16.msra.mxu0 %v878
        %900 = vmatpush.bf16.msra.mxu0 %v877
        %901 = vmatmul.bf16.gmra.mxu0 %v826
        %v902 = vpop.f32.mrf.mxu0
        %v903 = vadd.f32 %v844, %v902
        %v904 = vpop.f32.mrf.mxu0
        %v905 = vadd.f32 %v844, %v904
        %906 = vmatmul.bf16.gmra.mxu0 %v827
        %v907 = vpop.f32.mrf.mxu0
        %v908 = vadd.f32 %v844, %v907
        %v909 = vpop.f32.mrf.mxu0
        %v910 = vadd.f32 %v844, %v909
        %911 = vdwg.mxu0
        %v912 = vpack.c.bf16 %v903, %v903
        %v913 = vpack.c.bf16 %v905, %v905
        %v914 = vpack.c.bf16 %v908, %v908
        %v915 = vpack.c.bf16 %v910, %v910
        %916 = vst [vmem:[%s396] sm:$0xf] %v912
        %917 = vst [vmem:[%s396 + $0x4] sm:$0xf] %v913
        %918 = vst [vmem:[%s396 + $0x8] sm:$0xf] %v914
        %919 = vst [vmem:[%s396 + $0xc] sm:$0xf] %v915
        %s920 = sand.u32 %s190, 1
        %s921 = scalar_lea.sflag [#allocation4], %s920
        %s922 = sand.u32 %s190, 1
        %s923 = smul.addr %s922, 16
        %s924 = scalar_lea.vmem [#allocation13], %s923
        // Predicated region
        $region69: #{tpu_custom_call.1} parent=43 // pred_check
          %p925 = pneg %p200
        $region70: #{tpu_custom_call.1} parent=43 // pred_check_branch
          %927 = sbr.rel (%p925) target = $region72
        $region71: #{tpu_custom_call.1} parent=43 // pred_region
          %s928 = smul.u32 4, %s33
          %930 = vsyncadd %s921, 0
          %s931 = smul.addr %s32, 8
          %s932 = sadd.s32 %s928, %s931
          %s933 = smul.addr %s932, 4
          %s934 = scalar_lea.hbm %s6, %s933
          %s935 = sshll.u32 %s924, 4
          %s936 = int_to_ptr.vmem [resolvable:$true] %s935
          %s937 = sshll.u32 %s934, 4
          %s938 = int_to_ptr.hbm [resolvable:$true] %s937
          %943 = dma.vmem_to_hbm [thread:$0]  %s936, 256, %s938, %s921, 64, 64, 4
        $region72: #{tpu_custom_call.1} parent=43 // pred_fallthru
          _
      $region44: #{tpu_custom_call.1} parent=5 // pred_fallthru
        _
      %p944 = scmp.le.s32.totalorder 2, %s23
      // Predicated region
      $region73: #{tpu_custom_call.1} parent=5 // pred_check
        %p945 = pneg %p944
      $region74: #{tpu_custom_call.1} parent=5 // pred_check_branch
        %947 = sbr.rel (%p945) target = $region76
      $region75: #{tpu_custom_call.1} parent=5 // pred_region
        %s948 = ssub.s32 %s23, 2
        // Predicated region
        $region77: #{tpu_custom_call.1} parent=75 // pred_check
          %p949 = pneg %p206
        $region78: #{tpu_custom_call.1} parent=75 // pred_check_branch
          %951 = sbr.rel (%p949) target = $region80
        $region79: #{tpu_custom_call.1} parent=75 // pred_region
          %s952 = sand.u32 %s191, 1
          %s953 = scalar_lea.sflag [#allocation4], %s952
          %s954 = sand.u32 %s191, 1
          %s955 = smul.addr %s954, 16
          %s956 = scalar_lea.vmem [#allocation13], %s955
          %958 = dma.done %s953, 256
        $region80: #{tpu_custom_call.1} parent=75 // pred_fallthru
          _
      $region76: #{tpu_custom_call.1} parent=5 // pred_fallthru
        _
    $region6: #{tpu_custom_call.1} parent=1 // loop_footer
      %s27 = sadd.s32 1, %s23
    $region7: #{tpu_custom_call.1} parent=1 // loop_footer_branch
      %22 = sbr.rel target = $region3
    $region8: #{tpu_custom_call.1} parent=1 // loop_exit
      _
    %959 = vsyncpa [#allocation3], 1
    %s960 = scalar_lea.sflag [#allocation3], 1
    %961 = vsyncpa %s960, 1
    %962 = vsyncpa [#allocation6], 1
    %s963 = scalar_lea.sflag [#allocation6], 1
    %964 = vsyncpa %s963, 1
    %965 = vsyncpa [#allocation9], 1
    %966 = vsyncpa [#allocation12], 1
    %967 = vsyncpa [#allocation4], 1
    %s968 = scalar_lea.sflag [#allocation4], 1
    %969 = vsyncpa %s968, 1

// kernel: tpu_custom_call.1
$region0: #{tpu_custom_call.1}
  #allocation0 [shape = 'u32[]', space=smem, size = 0x4, offset = 0x4, fixed_abs, tag = 'smem constant byte address 0x4 - core index']
  #allocation1 [shape = 'u32[72,128]{1,0:T(1,128)}', space=vmem, size = 0x9000, scoped, tag = 'internal scratch']
  %s0 = inlined_call_operand.hbm [shape: bf16[2,64,128], index: 0, kind: input, shape index: {}]
  %s1 = inlined_call_operand.hbm [shape: bf16[2,2,8,128], index: 1, kind: input, shape index: {}]
  %s2 = inlined_call_operand.hbm [shape: bf16[128,128], index: 2, kind: input, shape index: {}]
  %s3 = inlined_call_operand.hbm [shape: bf16[128,128], index: 3, kind: input, shape index: {}]
  %s4 = inlined_call_operand.hbm [shape: bf16[128,128], index: 4, kind: input, shape index: {}]
  %s5 = inlined_call_operand.hbm [shape: f32[8,128], index: 5, kind: input, shape index: {}]
  %s6 = inlined_call_operand.hbm [shape: bf16[2,64,128], index: 6, kind: output, shape index: {}]
  %s7 = sld [smem:[#allocation0]]
  $region81: #{tpu_custom_call.1} parent=0
    _
  %s9 = ssub.s32 1, %s7
  %s10 = scalar_select 0, %s9, %s7
  $region1: #{tpu_custom_call.1} parent=0
    #allocation2 [shape = 'u8[16384]{0}', space=vmem, size = 0x4000, scoped, tag = 'input window, operand 0']
    #allocation3 [shape = 's32[2]{0}', space=sflag, size = 0x8, scoped, tag = 'scoped memory for tpu_custom_call.1']
    #allocation4 [shape = 's32[2]{0}', space=sflag, size = 0x8, scoped, tag = 'scoped memory for tpu_custom_call.1']
    #allocation5 [shape = 'u8[4096]{0}', space=vmem, size = 0x1000, scoped, tag = 'input window, operand 1']
    #allocation6 [shape = 's32[2]{0}', space=sflag, size = 0x8, scoped, tag = 'scoped memory for tpu_custom_call.1']
    #allocation7 [shape = 'u8[32768]{0}', space=vmem, size = 0x8000, scoped, tag = 'input window, operand 2, single buffered']
    #allocation8 [shape = 'u8[32768]{0}', space=vmem, size = 0x8000, scoped, tag = 'input window, operand 3, single buffered']
    #allocation9 [shape = 's32[1]{0}', space=sflag, size = 0x4, scoped, tag = 'scoped memory for tpu_custom_call.1']
    #allocation10 [shape = 'u8[32768]{0}', space=vmem, size = 0x8000, scoped, tag = 'input window, operand 4, single buffered']
    #allocation11 [shape = 'u8[4096]{0}', space=vmem, size = 0x1000, scoped, tag = 'input window, operand 5, single buffered']
    #allocation12 [shape = 's32[1]{0}', space=sflag, size = 0x4, scoped, tag = 'scoped memory for tpu_custom_call.1']
    #allocation13 [shape = 'u8[16384]{0}', space=vmem, size = 0x4000, scoped, tag = 'output window, operand 0']
    %11 = vsyncpa [#allocation3], 0
    %s12 = scalar_lea.sflag [#allocation3], 1
    %13 = vsyncpa %s12, 0
    %14 = vsyncpa [#allocation6], 0
    %s15 = scalar_lea.sflag [#allocation6], 1
    %16 = vsyncpa %s15, 0
    %17 = vsyncpa [#allocation9], 0
    %18 = vsyncpa [#allocation12], 0
    %19 = vsyncpa [#allocation4], 0
    %s20 = scalar_lea.sflag [#allocation4], 1
    %21 = vsyncpa %s20, 0
    loop: start=0, step=1, limit=6
    $region2: #{tpu_custom_call.1} parent=1 // loop_pre_header
      _
    $region3: #{tpu_custom_call.1} parent=1 // loop_header
      %s23 = sphi 0, %s27
      %p24 = scmp.ge.s32.totalorder %s23, 6
      %s30 = sphi 0, %s42
      %s31 = sphi 0, %s38
      %s32 = sphi 0, %s30
      %s33 = sphi 0, %s31
      %s34 = sphi 0, %s32
      %s35 = sphi 0, %s33
      %s47 = sphi 0, %s49
      %s50 = sphi 0, %s47
      %s51 = sphi 0, %s50
      %s67 = sphi 0, %s51
      %s75 = sphi 0, %s77
      %s78 = sphi 0, %s75
      %s79 = sphi 0, %s78
      %s95 = sphi 0, %s79
      %s99 = sphi 0, %s99
      %s101 = sphi 0, %s99
      %s102 = sphi 0, %s101
      %s116 = sphi 0, %s102
      %s120 = sphi 0, %s120
      %s122 = sphi 0, %s120
      %s123 = sphi 0, %s122
      %s137 = sphi 0, %s123
      %s141 = sphi 0, %s141
      %s143 = sphi 0, %s141
      %s144 = sphi 0, %s143
      %s158 = sphi 0, %s144
      %s162 = sphi 0, %s162
      %s164 = sphi 0, %s162
      %s165 = sphi 0, %s164
      %s179 = sphi 0, %s165
      %s187 = sphi 0, %s189
      %s190 = sphi 0, %s187
      %s191 = sphi 0, %s190
      %s207 = sphi 0, %s191
    $region4: #{tpu_custom_call.1} parent=1 // loop_header_branch
      %26 = sbr.rel (%p24) target = $region8
    $region5: #{tpu_custom_call.1} parent=1 // loop_body
      %s28 = ssub.s32 %s23, 1
      %s29 = ssub.s32 %s23, 2
      %s36 = sadd.s32 1, %s31
      %p37 = scmp.ge.s32.totalorder %s36, 2
      %s38 = scalar_select %p37, 0, %s36
      %s39 = sadd.s32 1, %s30
      %s40 = scalar_select %p37, %s39, %s30
      %p41 = scmp.ge.s32.totalorder %s40, 2
      %s42 = scalar_select %p41, 0, %s40
      %s43 = ssub.s32 %s30, %s42
      %s44 = ssub.s32 %s31, %s38
      %s45 = sor.u32 %s43, %s44
      %p46 = scmp.eq.s32.totalorder %s45, 0
      %s48 = sadd.s32 %s47, 1
      %s49 = scalar_select %p46, %s47, %s48
      %p52 = pneg %p46
      %p53 = scmp.eq.s32.totalorder %s23, 3
      %p54 = por %p52, %p53
      %p55 = scmp.ne.s32.totalorder %s47, %s50
      %p56 = scmp.eq.s32.totalorder %s23, 0
      %p57 = por %p55, %p56
      %p58 = scmp.ne.s32.totalorder %s47, %s50
      %p59 = scmp.eq.s32.totalorder %s28, 3
      %p60 = por %p58, %p59
      %p61 = scmp.ne.s32.totalorder %s50, %s51
      %p62 = scmp.eq.s32.totalorder %s28, 0
      %p63 = por %p61, %p62
      %p64 = scmp.ne.s32.totalorder %s50, %s51
      %p65 = scmp.eq.s32.totalorder %s29, 3
      %p66 = por %p64, %p65
      %p68 = scmp.ne.s32.totalorder %s51, %s67
      %p69 = scmp.eq.s32.totalorder %s29, 0
      %p70 = por %p68, %p69
      %s71 = ssub.s32 %s30, %s42
      %s72 = ssub.s32 %s31, %s38
      %s73 = sor.u32 %s71, %s72
      %p74 = scmp.eq.s32.totalorder %s73, 0
      %s76 = sadd.s32 %s75, 1
      %s77 = scalar_select %p74, %s75, %s76
      %p80 = pneg %p74
      %p81 = scmp.eq.s32.totalorder %s23, 3
      %p82 = por %p80, %p81
      %p83 = scmp.ne.s32.totalorder %s75, %s78
      %p84 = scmp.eq.s32.totalorder %s23, 0
      %p85 = por %p83, %p84
      %p86 = scmp.ne.s32.totalorder %s75, %s78
      %p87 = scmp.eq.s32.totalorder %s28, 3
      %p88 = por %p86, %p87
      %p89 = scmp.ne.s32.totalorder %s78, %s79
      %p90 = scmp.eq.s32.totalorder %s28, 0
      %p91 = por %p89, %p90
      %p92 = scmp.ne.s32.totalorder %s78, %s79
      %p93 = scmp.eq.s32.totalorder %s29, 3
      %p94 = por %p92, %p93
      %p96 = scmp.ne.s32.totalorder %s79, %s95
      %p97 = scmp.eq.s32.totalorder %s29, 0
      %p98 = por %p96, %p97
      %s100 = sadd.s32 %s99, 1
      %p103 = scmp.eq.s32.totalorder %s23, 3
      %p104 = scmp.ne.s32.totalorder %s99, %s101
      %p105 = scmp.eq.s32.totalorder %s23, 0
      %p106 = por %p104, %p105
      %p107 = scmp.ne.s32.totalorder %s99, %s101
      %p108 = scmp.eq.s32.totalorder %s28, 3
      %p109 = por %p107, %p108
      %p110 = scmp.ne.s32.totalorder %s101, %s102
      %p111 = scmp.eq.s32.totalorder %s28, 0
      %p112 = por %p110, %p111
      %p113 = scmp.ne.s32.totalorder %s101, %s102
      %p114 = scmp.eq.s32.totalorder %s29, 3
      %p115 = por %p113, %p114
      %p117 = scmp.ne.s32.totalorder %s102, %s116
      %p118 = scmp.eq.s32.totalorder %s29, 0
      %p119 = por %p117, %p118
      %s121 = sadd.s32 %s120, 1
      %p124 = scmp.eq.s32.totalorder %s23, 3
      %p125 = scmp.ne.s32.totalorder %s120, %s122
      %p126 = scmp.eq.s32.totalorder %s23, 0
      %p127 = por %p125, %p126
      %p128 = scmp.ne.s32.totalorder %s120, %s122
      %p129 = scmp.eq.s32.totalorder %s28, 3
      %p130 = por %p128, %p129
      %p131 = scmp.ne.s32.totalorder %s122, %s123
      %p132 = scmp.eq.s32.totalorder %s28, 0
      %p133 = por %p131, %p132
      %p134 = scmp.ne.s32.totalorder %s122, %s123
      %p135 = scmp.eq.s32.totalorder %s29, 3
      %p136 = por %p134, %p135
      %p138 = scmp.ne.s32.totalorder %s123, %s137
      %p139 = scmp.eq.s32.totalorder %s29, 0
      %p140 = por %p138, %p139
      %s142 = sadd.s32 %s141, 1
      %p145 = scmp.eq.s32.totalorder %s23, 3
      %p146 = scmp.ne.s32.totalorder %s141, %s143
      %p147 = scmp.eq.s32.totalorder %s23, 0
      %p148 = por %p146, %p147
      %p149 = scmp.ne.s32.totalorder %s141, %s143
      %p150 = scmp.eq.s32.totalorder %s28, 3
      %p151 = por %p149, %p150
      %p152 = scmp.ne.s32.totalorder %s143, %s144
      %p153 = scmp.eq.s32.totalorder %s28, 0
      %p154 = por %p152, %p153
      %p155 = scmp.ne.s32.totalorder %s143, %s144
      %p156 = scmp.eq.s32.totalorder %s29, 3
      %p157 = por %p155, %p156
      %p159 = scmp.ne.s32.totalorder %s144, %s158
      %p160 = scmp.eq.s32.totalorder %s29, 0
      %p161 = por %p159, %p160
      %s163 = sadd.s32 %s162, 1
      %p166 = scmp.eq.s32.totalorder %s23, 3
      %p167 = scmp.ne.s32.totalorder %s162, %s164
      %p168 = scmp.eq.s32.totalorder %s23, 0
      %p169 = por %p167, %p168
      %p170 = scmp.ne.s32.totalorder %s162, %s164
      %p171 = scmp.eq.s32.totalorder %s28, 3
      %p172 = por %p170, %p171
      %p173 = scmp.ne.s32.totalorder %s164, %s165
      %p174 = scmp.eq.s32.totalorder %s28, 0
      %p175 = por %p173, %p174
      %p176 = scmp.ne.s32.totalorder %s164, %s165
      %p177 = scmp.eq.s32.totalorder %s29, 3
      %p178 = por %p176, %p177
      %p180 = scmp.ne.s32.totalorder %s165, %s179
      %p181 = scmp.eq.s32.totalorder %s29, 0
      %p182 = por %p180, %p181
      %s183 = ssub.s32 %s30, %s42
      %s184 = ssub.s32 %s31, %s38
      %s185 = sor.u32 %s183, %s184
      %p186 = scmp.eq.s32.totalorder %s185, 0
      %s188 = sadd.s32 %s187, 1
      %s189 = scalar_select %p186, %s187, %s188
      %p192 = pneg %p186
      %p193 = scmp.eq.s32.totalorder %s23, 3
      %p194 = por %p192, %p193
      %p195 = scmp.ne.s32.totalorder %s187, %s190
      %p196 = scmp.eq.s32.totalorder %s23, 0
      %p197 = por %p195, %p196
      %p198 = scmp.ne.s32.totalorder %s187, %s190
      %p199 = scmp.eq.s32.totalorder %s28, 3
      %p200 = por %p198, %p199
      %p201 = scmp.ne.s32.totalorder %s190, %s191
      %p202 = scmp.eq.s32.totalorder %s28, 0
      %p203 = por %p201, %p202
      %p204 = scmp.ne.s32.totalorder %s190, %s191
      %p205 = scmp.eq.s32.totalorder %s29, 3
      %p206 = por %p204, %p205
      %p208 = scmp.ne.s32.totalorder %s191, %s207
      %p209 = scmp.eq.s32.totalorder %s29, 0
      %p210 = por %p208, %p209
      %p211 = scmp.le.s32.totalorder 1, %s23
      %p212 = scmp.lt.s32.totalorder %s23, 5
      %p213 = pnand %p211, %p212
      %p214 = pneg %p213
      // Predicated region
      $region9: #{tpu_custom_call.1} parent=5 // pred_check
        _
      $region10: #{tpu_custom_call.1} parent=5 // pred_check_branch
        %216 = sbr.rel (%p213) target = $region12
      $region11: #{tpu_custom_call.1} parent=5 // pred_region
        %s217 = ssub.s32 %s23, 1
        // Predicated region
        $region13: #{tpu_custom_call.1} parent=11 // pred_check
          %p218 = pneg %p112
        $region14: #{tpu_custom_call.1} parent=11 // pred_check_branch
          %220 = sbr.rel (%p218) target = $region16
        $region15: #{tpu_custom_call.1} parent=11 // pred_region
          %222 = vsyncadd [#allocation6], 0
          %s223 = sshll.u32 %s2, 4
          %s224 = int_to_ptr.hbm [resolvable:$true] %s223
          %s225 = sshll.u32 [#allocation7], 4
          %s226 = int_to_ptr.vmem [resolvable:$true] %s225
          %231 = dma.hbm_to_vmem [thread:$0]  %s224, 1024, %s226, [#allocation6], 64, 64, 4
        $region16: #{tpu_custom_call.1} parent=11 // pred_fallthru
          _
        // Predicated region
        $region17: #{tpu_custom_call.1} parent=11 // pred_check
          %p232 = pneg %p133
        $region18: #{tpu_custom_call.1} parent=11 // pred_check_branch
          %234 = sbr.rel (%p232) target = $region20
        $region19: #{tpu_custom_call.1} parent=11 // pred_region
          %236 = vsyncadd [#allocation9], 0
          %s237 = sshll.u32 %s3, 4
          %s238 = int_to_ptr.hbm [resolvable:$true] %s237
          %s239 = sshll.u32 [#allocation8], 4
          %s240 = int_to_ptr.vmem [resolvable:$true] %s239
          %245 = dma.hbm_to_vmem [thread:$0]  %s238, 1024, %s240, [#allocation9], 64, 64, 4
        $region20: #{tpu_custom_call.1} parent=11 // pred_fallthru
          _
        // Predicated region
        $region21: #{tpu_custom_call.1} parent=11 // pred_check
          %p246 = pneg %p154
        $region22: #{tpu_custom_call.1} parent=11 // pred_check_branch
          %248 = sbr.rel (%p246) target = $region24
        $region23: #{tpu_custom_call.1} parent=11 // pred_region
          %250 = vsyncadd [#allocation9], 0
          %s251 = sshll.u32 %s4, 4
          %s252 = int_to_ptr.hbm [resolvable:$true] %s251
          %s253 = sshll.u32 [#allocation10], 4
          %s254 = int_to_ptr.vmem [resolvable:$true] %s253
          %259 = dma.hbm_to_vmem [thread:$0]  %s252, 1024, %s254, [#allocation9], 64, 64, 4
        $region24: #{tpu_custom_call.1} parent=11 // pred_fallthru
          _
        // Predicated region
        $region25: #{tpu_custom_call.1} parent=11 // pred_check
          %p260 = pneg %p175
        $region26: #{tpu_custom_call.1} parent=11 // pred_check_branch
          %262 = sbr.rel (%p260) target = $region28
        $region27: #{tpu_custom_call.1} parent=11 // pred_region
          %264 = vsyncadd [#allocation12], 0
          %s266 = sshll.u32 %s5, 4
          %s267 = int_to_ptr.hbm [resolvable:$true] %s266
          %s268 = sshll.u32 [#allocation11], 4
          %s269 = int_to_ptr.vmem [resolvable:$true] %s268
          %271 = dma.hbm_to_vmem [thread:$0]  %s267, 128, %s269, [#allocation12]
        $region28: #{tpu_custom_call.1} parent=11 // pred_fallthru
          _
      $region12: #{tpu_custom_call.1} parent=5 // pred_fallthru
        _
      %p272 = scmp.lt.s32.totalorder %s23, 4
      // Predicated region
      $region29: #{tpu_custom_call.1} parent=5 // pred_check
        %p273 = pneg %p272
      $region30: #{tpu_custom_call.1} parent=5 // pred_check_branch
        %275 = sbr.rel (%p273) target = $region32
      $region31: #{tpu_custom_call.1} parent=5 // pred_region
        // Predicated region
        $region33: #{tpu_custom_call.1} parent=31 // pred_check
          %p276 = pneg %p57
        $region34: #{tpu_custom_call.1} parent=31 // pred_check_branch
          %278 = sbr.rel (%p276) target = $region36
        $region35: #{tpu_custom_call.1} parent=31 // pred_region
          %s279 = sand.u32 %s47, 1
          %s280 = scalar_lea.sflag [#allocation3], %s279
          %s281 = sand.u32 %s47, 1
          %s282 = smul.addr %s281, 16
          %s283 = scalar_lea.vmem [#allocation2], %s282
          %s284 = smul.u32 4, %s31
          %286 = vsyncadd %s280, 0
          %s287 = smul.addr %s30, 8
          %s288 = sadd.s32 %s284, %s287
          %s289 = smul.addr %s288, 4
          %s290 = scalar_lea.hbm %s0, %s289
          %s291 = sshll.u32 %s290, 4
          %s292 = int_to_ptr.hbm [resolvable:$true] %s291
          %s293 = sshll.u32 %s283, 4
          %s294 = int_to_ptr.vmem [resolvable:$true] %s293
          %299 = dma.hbm_to_vmem [thread:$0]  %s292, 256, %s294, %s280, 64, 64, 4
        $region36: #{tpu_custom_call.1} parent=31 // pred_fallthru
          _
        // Predicated region
        $region37: #{tpu_custom_call.1} parent=31 // pred_check
          %p300 = pneg %p85
        $region38: #{tpu_custom_call.1} parent=31 // pred_check_branch
          %302 = sbr.rel (%p300) target = $region40
        $region39: #{tpu_custom_call.1} parent=31 // pred_region
          %s303 = sand.u32 %s23, 1
          %s304 = scalar_lea.sflag [#allocation6], %s303
          %s305 = sand.u32 %s75, 1
          %s306 = smul.addr %s305, 4
          %s307 = scalar_lea.vmem [#allocation5], %s306
          %309 = vsyncadd %s304, 0
          %s310 = smul.addr %s30, 2
          %s311 = sadd.s32 %s31, %s310
          %s312 = smul.addr %s311, 4
          %s313 = scalar_lea.hbm %s1, %s312
          %s315 = sshll.u32 %s313, 4
          %s316 = int_to_ptr.hbm [resolvable:$true] %s315
          %s317 = sshll.u32 %s307, 4
          %s318 = int_to_ptr.vmem [resolvable:$true] %s317
          %320 = dma.hbm_to_vmem [thread:$0]  %s316, 64, %s318, %s304
        $region40: #{tpu_custom_call.1} parent=31 // pred_fallthru
          _
      $region32: #{tpu_custom_call.1} parent=5 // pred_fallthru
        _
      %p321 = scmp.le.s32.totalorder 1, %s23
      %p322 = scmp.lt.s32.totalorder %s23, 5
      %p323 = pnand %p321, %p322
      %p324 = pneg %p323
      // Predicated region
      $region41: #{tpu_custom_call.1} parent=5 // pred_check
        _
      $region42: #{tpu_custom_call.1} parent=5 // pred_check_branch
        %326 = sbr.rel (%p323) target = $region44
      $region43: #{tpu_custom_call.1} parent=5 // pred_region
        %s327 = ssub.s32 %s23, 1
        %s328 = sand.u32 %s50, 1
        %s329 = scalar_lea.sflag [#allocation3], %s328
        %s330 = sand.u32 %s50, 1
        %s331 = smul.addr %s330, 16
        %s332 = scalar_lea.vmem [#allocation2], %s331
        // Predicated region
        $region45: #{tpu_custom_call.1} parent=43 // pred_check
          %p333 = pneg %p63
        $region46: #{tpu_custom_call.1} parent=43 // pred_check_branch
          %335 = sbr.rel (%p333) target = $region48
        $region47: #{tpu_custom_call.1} parent=43 // pred_region
          %337 = dma.done %s329, 256
        $region48: #{tpu_custom_call.1} parent=43 // pred_fallthru
          _
        %s338 = sand.u32 %s28, 1
        %s339 = scalar_lea.sflag [#allocation6], %s338
        %s340 = sand.u32 %s78, 1
        %s341 = smul.addr %s340, 4
        %s342 = scalar_lea.vmem [#allocation5], %s341
        // Predicated region
        $region49: #{tpu_custom_call.1} parent=43 // pred_check
          %p343 = pneg %p91
        $region50: #{tpu_custom_call.1} parent=43 // pred_check_branch
          %345 = sbr.rel (%p343) target = $region52
        $region51: #{tpu_custom_call.1} parent=43 // pred_region
          %347 = dma.done %s339, 64
        $region52: #{tpu_custom_call.1} parent=43 // pred_fallthru
          _
        // Predicated region
        $region53: #{tpu_custom_call.1} parent=43 // pred_check
          %p348 = pneg %p112
        $region54: #{tpu_custom_call.1} parent=43 // pred_check_branch
          %350 = sbr.rel (%p348) target = $region56
        $region55: #{tpu_custom_call.1} parent=43 // pred_region
          %352 = dma.done [#allocation6], 1024
        $region56: #{tpu_custom_call.1} parent=43 // pred_fallthru
          _
        // Predicated region
        $region57: #{tpu_custom_call.1} parent=43 // pred_check
          %p353 = pneg %p133
        $region58: #{tpu_custom_call.1} parent=43 // pred_check_branch
          %355 = sbr.rel (%p353) target = $region60
        $region59: #{tpu_custom_call.1} parent=43 // pred_region
          %357 = dma.done [#allocation9], 1024
        $region60: #{tpu_custom_call.1} parent=43 // pred_fallthru
          _
        // Predicated region
        $region61: #{tpu_custom_call.1} parent=43 // pred_check
          %p358 = pneg %p154
        $region62: #{tpu_custom_call.1} parent=43 // pred_check_branch
          %360 = sbr.rel (%p358) target = $region64
        $region63: #{tpu_custom_call.1} parent=43 // pred_region
          %362 = dma.done [#allocation9], 1024
        $region64: #{tpu_custom_call.1} parent=43 // pred_fallthru
          _
        // Predicated region
        $region65: #{tpu_custom_call.1} parent=43 // pred_check
          %p363 = pneg %p175
        $region66: #{tpu_custom_call.1} parent=43 // pred_check_branch
          %365 = sbr.rel (%p363) target = $region68
        $region67: #{tpu_custom_call.1} parent=43 // pred_region
          %367 = dma.done [#allocation12], 128
        $region68: #{tpu_custom_call.1} parent=43 // pred_fallthru
          _
        %s368 = sand.u32 %s50, 1
        %s369 = scalar_lea.sflag [#allocation3], %s368
        %s370 = sand.u32 %s50, 1
        %s371 = smul.addr %s370, 16
        %s372 = scalar_lea.vmem [#allocation2], %s371
        %p373 = pneg %p63
        %p374 = pneg %p60
        %s375 = sand.u32 %s28, 1
        %s376 = scalar_lea.sflag [#allocation6], %s375
        %s377 = sand.u32 %s78, 1
        %s378 = smul.addr %s377, 4
        %s379 = scalar_lea.vmem [#allocation5], %s378
        %p380 = pneg %p91
        %p381 = pneg %p88
        %p382 = pneg %p112
        %p383 = pneg %p109
        %p384 = pneg %p133
        %p385 = pneg %p130
        %p386 = pneg %p154
        %p387 = pneg %p151
        %p388 = pneg %p175
        %p389 = pneg %p172
        %p390 = pneg %p203
        %p391 = pneg %p200
        %s392 = sand.u32 %s190, 1
        %s393 = scalar_lea.sflag [#allocation4], %s392
        %s394 = sand.u32 %s190, 1
        %s395 = smul.addr %s394, 16
        %s396 = scalar_lea.vmem [#allocation13], %s395
        %s397 = smul.u32 4, %s33
        %s398 = smul.u32 4, %s33
        %v399 = vld [vmem:[#allocation11] sm:$0xff]
        %v400 = vld [vmem:[%s332] sm:$0xf]
        %v401 = vld [vmem:[%s332 + $0x4] sm:$0xf]
        %v402 = vld [vmem:[%s332 + $0x8] sm:$0xf]
        %v403 = vld [vmem:[%s332 + $0xc] sm:$0xf]
        %v404 = vld [vmem:[%s342] sm:$0xf]
        %v409 = vunpack.c.l.b16 %v400
        %v410 = vunpack.c.l.b16 %v401
        %v411 = vunpack.c.l.b16 %v402
        %v412 = vunpack.c.l.b16 %v403
        %v413 = vpack.c.b16 %v410, %v409
        %v414 = vpack.c.b16 %v412, %v411
        %v417 = vunpack.c.l.bf16 %v413
        %v418 = vunpack.c.h.bf16 %v413
        %v419 = vunpack.c.l.bf16 %v414
        %v420 = vunpack.c.h.bf16 %v414
        %v421 = vunpack.c.l.bf16 %v404
        %422 = vadd.xlane.f32.xlu0 %v417
        %v423 = vpop.xlane.xlu0 %422
        %424 = vadd.xlane.f32.xlu0 %v418
        %v425 = vpop.xlane.xlu0 %424
        %426 = vadd.xlane.f32.xlu0 %v419
        %v427 = vpop.xlane.xlu0 %426
        %428 = vadd.xlane.f32.xlu0 %v420
        %v429 = vpop.xlane.xlu0 %428
        %430 = vadd.xlane.f32.xlu0 %v421
        %v431 = vpop.xlane.xlu0 %430
        %v432 = vrcp.pop 128.0
        %v433 = vmul.f32 128.0, %v432
        %v434 = vsub.f32 1.0, %v433
        %v435 = vmul.f32 %v432, %v434
        %v436 = vadd.f32 %v432, %v435
        %vm437 = vweird.f32 %v432
        %v438 = vsel %vm437, %v432, %v436
        %v439 = vmul.f32 %v423, %v438
        %v440 = vmul.f32 %v425, %v438
        %v441 = vmul.f32 %v427, %v438
        %v442 = vmul.f32 %v429, %v438
        %v443 = vmul.f32 %v431, %v438
        %v444 = vsub.f32 %v417, %v439
        %v445 = vsub.f32 %v418, %v440
        %v446 = vsub.f32 %v419, %v441
        %v447 = vsub.f32 %v420, %v442
        %v448 = vsub.f32 %v421, %v443
        %v449 = vmul.f32 %v444, %v444
        %v450 = vmul.f32 %v445, %v445
        %v451 = vmul.f32 %v446, %v446
        %v452 = vmul.f32 %v447, %v447
        %v453 = vmul.f32 %v448, %v448
        %454 = vadd.xlane.f32.xlu0 %v449
        %v455 = vpop.xlane.xlu0 %454
        %456 = vadd.xlane.f32.xlu0 %v450
        %v457 = vpop.xlane.xlu0 %456
        %458 = vadd.xlane.f32.xlu0 %v451
        %v459 = vpop.xlane.xlu0 %458
        %460 = vadd.xlane.f32.xlu0 %v452
        %v461 = vpop.xlane.xlu0 %460
        %462 = vadd.xlane.f32.xlu0 %v453
        %v463 = vpop.xlane.xlu0 %462
        %v464 = vmul.f32 %v455, %v438
        %v465 = vmul.f32 %v457, %v438
        %v466 = vmul.f32 %v459, %v438
        %v467 = vmul.f32 %v461, %v438
        %v468 = vmul.f32 %v463, %v438
        %v469 = vadd.f32 %v464, 1e-05
        %v470 = vadd.f32 %v465, 1e-05
        %v471 = vadd.f32 %v466, 1e-05
        %v472 = vadd.f32 %v467, 1e-05
        %v473 = vadd.f32 %v468, 1e-05
        %v474 = vrsqrt.pop %v469
        %v475 = vmul.f32 %v474, %v469
        %v476 = vmul.f32 %v475, %v474
        %v477 = vmul.f32 0.5, %v476
        %v478 = vsub.f32 1.5, %v477
        %v479 = vmul.f32 %v474, %v478
        %vm480 = vweird.f32 %v469
        %vm481 = vweird.f32 %v474
        %vm482 = vmor %vm480, %vm481
        %v483 = vsel %vm482, %v474, %v479
        %v484 = vrsqrt.pop %v470
        %v485 = vmul.f32 %v484, %v470
        %v486 = vmul.f32 %v485, %v484
        %v487 = vmul.f32 0.5, %v486
        %v488 = vsub.f32 1.5, %v487
        %v489 = vmul.f32 %v484, %v488
        %vm490 = vweird.f32 %v470
        %vm491 = vweird.f32 %v484
        %vm492 = vmor %vm490, %vm491
        %v493 = vsel %vm492, %v484, %v489
        %v494 = vrsqrt.pop %v471
        %v495 = vmul.f32 %v494, %v471
        %v496 = vmul.f32 %v495, %v494
        %v497 = vmul.f32 0.5, %v496
        %v498 = vsub.f32 1.5, %v497
        %v499 = vmul.f32 %v494, %v498
        %vm500 = vweird.f32 %v471
        %vm501 = vweird.f32 %v494
        %vm502 = vmor %vm500, %vm501
        %v503 = vsel %vm502, %v494, %v499
        %v504 = vrsqrt.pop %v472
        %v505 = vmul.f32 %v504, %v472
        %v506 = vmul.f32 %v505, %v504
        %v507 = vmul.f32 0.5, %v506
        %v508 = vsub.f32 1.5, %v507
        %v509 = vmul.f32 %v504, %v508
        %vm510 = vweird.f32 %v472
        %vm511 = vweird.f32 %v504
        %vm512 = vmor %vm510, %vm511
        %v513 = vsel %vm512, %v504, %v509
        %v514 = vrsqrt.pop %v473
        %v515 = vmul.f32 %v514, %v473
        %v516 = vmul.f32 %v515, %v514
        %v517 = vmul.f32 0.5, %v516
        %v518 = vsub.f32 1.5, %v517
        %v519 = vmul.f32 %v514, %v518
        %vm520 = vweird.f32 %v473
        %vm521 = vweird.f32 %v514
        %vm522 = vmor %vm520, %vm521
        %v523 = vsel %vm522, %v514, %v519
        %v524 = vmul.f32 %v444, %v483
        %v525 = vmul.f32 %v445, %v493
        %v526 = vmul.f32 %v446, %v503
        %v527 = vmul.f32 %v447, %v513
        %v528 = vmul.f32 %v448, %v523
        %v529 = vpack.c.bf16 %v525, %v524
        %v530 = vpack.c.bf16 %v527, %v526
        %v531 = vpack.c.bf16 %v528, %v528
        %v532 = vld [vmem:[#allocation7] sm:$0xf]
        %v533 = vld [vmem:[#allocation7 + $0x4] sm:$0xf]
        %v534 = vld [vmem:[#allocation7 + $0x8] sm:$0xf]
        %v535 = vld [vmem:[#allocation7 + $0xc] sm:$0xf]
        %v536 = vld [vmem:[#allocation7 + $0x10] sm:$0xf]
        %v537 = vld [vmem:[#allocation7 + $0x14] sm:$0xf]
        %v538 = vld [vmem:[#allocation7 + $0x18] sm:$0xf]
        %v539 = vld [vmem:[#allocation7 + $0x1c] sm:$0xf]
        %v540 = vld [vmem:[#allocation7 + $0x20] sm:$0xf]
        %v541 = vld [vmem:[#allocation7 + $0x24] sm:$0xf]
        %v542 = vld [vmem:[#allocation7 + $0x28] sm:$0xf]
        %v543 = vld [vmem:[#allocation7 + $0x2c] sm:$0xf]
        %v544 = vld [vmem:[#allocation7 + $0x30] sm:$0xf]
        %v545 = vld [vmem:[#allocation7 + $0x34] sm:$0xf]
        %v546 = vld [vmem:[#allocation7 + $0x38] sm:$0xf]
        %v547 = vld [vmem:[#allocation7 + $0x3c] sm:$0xf]
        %v548 = vperm.slane %v399, 0
        %v565 = vunpack.c.l.b16 %v532
        %v566 = vunpack.c.l.b16 %v533
        %v567 = vunpack.c.l.b16 %v534
        %v568 = vunpack.c.l.b16 %v535
        %v569 = vunpack.c.l.b16 %v536
        %v570 = vunpack.c.l.b16 %v537
        %v571 = vunpack.c.l.b16 %v538
        %v572 = vunpack.c.l.b16 %v539
        %v573 = vunpack.c.l.b16 %v540
        %v574 = vunpack.c.l.b16 %v541
        %v575 = vunpack.c.l.b16 %v542
        %v576 = vunpack.c.l.b16 %v543
        %v577 = vunpack.c.l.b16 %v544
        %v578 = vunpack.c.l.b16 %v545
        %v579 = vunpack.c.l.b16 %v546
        %v580 = vunpack.c.l.b16 %v547
        %v581 = vpack.c.b16 %v566, %v565
        %v582 = vpack.c.b16 %v568, %v567
        %v583 = vpack.c.b16 %v570, %v569
        %v584 = vpack.c.b16 %v572, %v571
        %v585 = vpack.c.b16 %v574, %v573
        %v586 = vpack.c.b16 %v576, %v575
        %v587 = vpack.c.b16 %v578, %v577
        %v588 = vpack.c.b16 %v580, %v579
        %597 = vmatpush.bf16.msra.mxu0 %v588
        %598 = vmatpush.bf16.msra.mxu0 %v587
        %599 = vmatpush.bf16.msra.mxu0 %v586
        %600 = vmatpush.bf16.msra.mxu0 %v585
        %601 = vmatpush.bf16.msra.mxu0 %v584
        %602 = vmatpush.bf16.msra.mxu0 %v583
        %603 = vmatpush.bf16.msra.mxu0 %v582
        %604 = vmatpush.bf16.msra.mxu0 %v581
        %605 = vmatmul.bf16.gmra.mxu0 %v529
        %v606 = vpop.f32.mrf.mxu0
        %v607 = vadd.f32 %v548, %v606
        %v608 = vpop.f32.mrf.mxu0
        %v609 = vadd.f32 %v548, %v608
        %610 = vmatmul.bf16.gmra.mxu0 %v530
        %v611 = vpop.f32.mrf.mxu0
        %v612 = vadd.f32 %v548, %v611
        %v613 = vpop.f32.mrf.mxu0
        %v614 = vadd.f32 %v548, %v613
        %615 = vmatmul.bf16.gmra.mxu0 %v531
        %v616 = vpop.f32.mrf.mxu0
        %v617 = vadd.f32 %v548, %v616
        %v618 = vpop.f32.mrf.mxu0
        %619 = vdwg.mxu0
        %v620 = vld [vmem:[#allocation8] sm:$0xf]
        %v621 = vld [vmem:[#allocation8 + $0x4] sm:$0xf]
        %v622 = vld [vmem:[#allocation8 + $0x8] sm:$0xf]
        %v623 = vld [vmem:[#allocation8 + $0xc] sm:$0xf]
        %v624 = vld [vmem:[#allocation8 + $0x10] sm:$0xf]
        %v625 = vld [vmem:[#allocation8 + $0x14] sm:$0xf]
        %v626 = vld [vmem:[#allocation8 + $0x18] sm:$0xf]
        %v627 = vld [vmem:[#allocation8 + $0x1c] sm:$0xf]
        %v628 = vld [vmem:[#allocation8 + $0x20] sm:$0xf]
        %v629 = vld [vmem:[#allocation8 + $0x24] sm:$0xf]
        %v630 = vld [vmem:[#allocation8 + $0x28] sm:$0xf]
        %v631 = vld [vmem:[#allocation8 + $0x2c] sm:$0xf]
        %v632 = vld [vmem:[#allocation8 + $0x30] sm:$0xf]
        %v633 = vld [vmem:[#allocation8 + $0x34] sm:$0xf]
        %v634 = vld [vmem:[#allocation8 + $0x38] sm:$0xf]
        %v635 = vld [vmem:[#allocation8 + $0x3c] sm:$0xf]
        %v636 = vperm.slane %v399, 1
        %v653 = vunpack.c.l.b16 %v620
        %v654 = vunpack.c.l.b16 %v621
        %v655 = vunpack.c.l.b16 %v622
        %v656 = vunpack.c.l.b16 %v623
        %v657 = vunpack.c.l.b16 %v624
        %v658 = vunpack.c.l.b16 %v625
        %v659 = vunpack.c.l.b16 %v626
        %v660 = vunpack.c.l.b16 %v627
        %v661 = vunpack.c.l.b16 %v628
        %v662 = vunpack.c.l.b16 %v629
        %v663 = vunpack.c.l.b16 %v630
        %v664 = vunpack.c.l.b16 %v631
        %v665 = vunpack.c.l.b16 %v632
        %v666 = vunpack.c.l.b16 %v633
        %v667 = vunpack.c.l.b16 %v634
        %v668 = vunpack.c.l.b16 %v635
        %v669 = vpack.c.b16 %v654, %v653
        %v670 = vpack.c.b16 %v656, %v655
        %v671 = vpack.c.b16 %v658, %v657
        %v672 = vpack.c.b16 %v660, %v659
        %v673 = vpack.c.b16 %v662, %v661
        %v674 = vpack.c.b16 %v664, %v663
        %v675 = vpack.c.b16 %v666, %v665
        %v676 = vpack.c.b16 %v668, %v667
        %685 = vmatpush.bf16.msra.mxu0 %v676
        %686 = vmatpush.bf16.msra.mxu0 %v675
        %687 = vmatpush.bf16.msra.mxu0 %v674
        %688 = vmatpush.bf16.msra.mxu0 %v673
        %689 = vmatpush.bf16.msra.mxu0 %v672
        %690 = vmatpush.bf16.msra.mxu0 %v671
        %691 = vmatpush.bf16.msra.mxu0 %v670
        %692 = vmatpush.bf16.msra.mxu0 %v669
        %693 = vmatmul.bf16.gmra.mxu0 %v529
        %v694 = vpop.f32.mrf.mxu0
        %v695 = vadd.f32 %v636, %v694
        %v696 = vpop.f32.mrf.mxu0
        %v697 = vadd.f32 %v636, %v696
        %698 = vmatmul.bf16.gmra.mxu0 %v530
        %v699 = vpop.f32.mrf.mxu0
        %v700 = vadd.f32 %v636, %v699
        %v701 = vpop.f32.mrf.mxu0
        %v702 = vadd.f32 %v636, %v701
        %703 = vmatmul.bf16.gmra.mxu0 %v531
        %v704 = vpop.f32.mrf.mxu0
        %v705 = vadd.f32 %v636, %v704
        %v706 = vpop.f32.mrf.mxu0
        %707 = vdwg.mxu0
        %v708 = vmul.f32 %v695, 0.5
        %v709 = vmul.f32 %v697, 0.5
        %v710 = vmul.f32 %v700, 0.5
        %v711 = vmul.f32 %v702, 0.5
        %v712 = vmul.f32 %v705, 0.5
        %v713 = vtanh.pop %v708
        %v714 = vtanh.pop %v709
        %v715 = vtanh.pop %v710
        %v716 = vtanh.pop %v711
        %v717 = vtanh.pop %v712
        %v718 = vadd.f32 %v713, 1.0
        %v719 = vadd.f32 %v714, 1.0
        %v720 = vadd.f32 %v715, 1.0
        %v721 = vadd.f32 %v716, 1.0
        %v722 = vadd.f32 %v717, 1.0
        %v723 = vmul.f32 %v718, 0.5
        %v724 = vmul.f32 %v719, 0.5
        %v725 = vmul.f32 %v720, 0.5
        %v726 = vmul.f32 %v721, 0.5
        %v727 = vmul.f32 %v722, 0.5
        %v728 = vmul.f32 %v607, %v723
        %v729 = vmul.f32 %v609, %v724
        %v730 = vmul.f32 %v612, %v725
        %v731 = vmul.f32 %v614, %v726
        %v732 = vmul.f32 %v617, %v727
        %p733 = scmp.gt.s32.totalorder %s33, 0
        %s734 = scalar_select %p733, 1, 0
        %s735 = scvt.s32.f32 %s734
        %s736 = sadd.s32 %s33, 1
        %s737 = smul.u32 %s736, 32
        %p738 = scmp.lt.s32.totalorder %s737, 64
        %s739 = scalar_select %p738, 1, 0
        %s740 = scvt.s32.f32 %s739
        %v741 = vstv %s735
        %v742 = vmul.f32 %v732, %v741
        %v743 = vstv %s740
        %v744 = vmul.f32 %v732, %v743
        %vm749 = vcmask 1040384
        %v750 = vrot.slane %v728, 7
        %v751 = vrot.slane %v729, 7
        %v752 = vsel %vm749, %v750, %v751
        %v753 = vrot.slane %v730, 7
        %v754 = vsel %vm749, %v751, %v753
        %v755 = vrot.slane %v731, 7
        %v756 = vsel %vm749, %v753, %v755
        %v761 = vsel %vm749, %v742, %v750
        %vm762 = vcmask 1046528
        %v763 = vrot.slane %v728, 1
        %v764 = vrot.slane %v729, 1
        %v765 = vsel %vm762, %v763, %v764
        %v766 = vrot.slane %v730, 1
        %v767 = vsel %vm762, %v764, %v766
        %v768 = vrot.slane %v731, 1
        %v769 = vsel %vm762, %v766, %v768
        %v775 = vrot.slane %v744, 2
        %v777 = vsel %vm762, %v768, %v775
        %v778 = vperm.slane %v399, 2
        %v779 = vmul.f32 %v761, %v778
        %v780 = vmul.f32 %v752, %v778
        %v781 = vmul.f32 %v754, %v778
        %v782 = vmul.f32 %v756, %v778
        %v783 = vperm.slane %v399, 3
        %v784 = vmul.f32 %v728, %v783
        %v785 = vmul.f32 %v729, %v783
        %v786 = vmul.f32 %v730, %v783
        %v787 = vmul.f32 %v731, %v783
        %v788 = vadd.f32 %v779, %v784
        %v789 = vadd.f32 %v780, %v785
        %v790 = vadd.f32 %v781, %v786
        %v791 = vadd.f32 %v782, %v787
        %v792 = vperm.slane %v399, 4
        %v793 = vmul.f32 %v765, %v792
        %v794 = vmul.f32 %v767, %v792
        %v795 = vmul.f32 %v769, %v792
        %v796 = vmul.f32 %v777, %v792
        %v797 = vadd.f32 %v788, %v793
        %v798 = vadd.f32 %v789, %v794
        %v799 = vadd.f32 %v790, %v795
        %v800 = vadd.f32 %v791, %v796
        %v801 = vperm.slane %v399, 5
        %v802 = vadd.f32 %v797, %v801
        %v803 = vadd.f32 %v798, %v801
        %v804 = vadd.f32 %v799, %v801
        %v805 = vadd.f32 %v800, %v801
        %v806 = vmul.f32 %v802, 0.5
        %v807 = vmul.f32 %v803, 0.5
        %v808 = vmul.f32 %v804, 0.5
        %v809 = vmul.f32 %v805, 0.5
        %v810 = vtanh.pop %v806
        %v811 = vtanh.pop %v807
        %v812 = vtanh.pop %v808
        %v813 = vtanh.pop %v809
        %v814 = vadd.f32 %v810, 1.0
        %v815 = vadd.f32 %v811, 1.0
        %v816 = vadd.f32 %v812, 1.0
        %v817 = vadd.f32 %v813, 1.0
        %v818 = vmul.f32 %v814, 0.5
        %v819 = vmul.f32 %v815, 0.5
        %v820 = vmul.f32 %v816, 0.5
        %v821 = vmul.f32 %v817, 0.5
        %v822 = vmul.f32 %v802, %v818
        %v823 = vmul.f32 %v803, %v819
        %v824 = vmul.f32 %v804, %v820
        %v825 = vmul.f32 %v805, %v821
        %v826 = vpack.c.bf16 %v823, %v822
        %v827 = vpack.c.bf16 %v825, %v824
        %v828 = vld [vmem:[#allocation10] sm:$0xf]
        %v829 = vld [vmem:[#allocation10 + $0x4] sm:$0xf]
        %v830 = vld [vmem:[#allocation10 + $0x8] sm:$0xf]
        %v831 = vld [vmem:[#allocation10 + $0xc] sm:$0xf]
        %v832 = vld [vmem:[#allocation10 + $0x10] sm:$0xf]
        %v833 = vld [vmem:[#allocation10 + $0x14] sm:$0xf]
        %v834 = vld [vmem:[#allocation10 + $0x18] sm:$0xf]
        %v835 = vld [vmem:[#allocation10 + $0x1c] sm:$0xf]
        %v836 = vld [vmem:[#allocation10 + $0x20] sm:$0xf]
        %v837 = vld [vmem:[#allocation10 + $0x24] sm:$0xf]
        %v838 = vld [vmem:[#allocation10 + $0x28] sm:$0xf]
        %v839 = vld [vmem:[#allocation10 + $0x2c] sm:$0xf]
        %v840 = vld [vmem:[#allocation10 + $0x30] sm:$0xf]
        %v841 = vld [vmem:[#allocation10 + $0x34] sm:$0xf]
        %v842 = vld [vmem:[#allocation10 + $0x38] sm:$0xf]
        %v843 = vld [vmem:[#allocation10 + $0x3c] sm:$0xf]
        %v844 = vperm.slane %v399, 6
        %v861 = vunpack.c.l.b16 %v828
        %v862 = vunpack.c.l.b16 %v829
        %v863 = vunpack.c.l.b16 %v830
        %v864 = vunpack.c.l.b16 %v831
        %v865 = vunpack.c.l.b16 %v832
        %v866 = vunpack.c.l.b16 %v833
        %v867 = vunpack.c.l.b16 %v834
        %v868 = vunpack.c.l.b16 %v835
        %v869 = vunpack.c.l.b16 %v836
        %v870 = vunpack.c.l.b16 %v837
        %v871 = vunpack.c.l.b16 %v838
        %v872 = vunpack.c.l.b16 %v839
        %v873 = vunpack.c.l.b16 %v840
        %v874 = vunpack.c.l.b16 %v841
        %v875 = vunpack.c.l.b16 %v842
        %v876 = vunpack.c.l.b16 %v843
        %v877 = vpack.c.b16 %v862, %v861
        %v878 = vpack.c.b16 %v864, %v863
        %v879 = vpack.c.b16 %v866, %v865
        %v880 = vpack.c.b16 %v868, %v867
        %v881 = vpack.c.b16 %v870, %v869
        %v882 = vpack.c.b16 %v872, %v871
        %v883 = vpack.c.b16 %v874, %v873
        %v884 = vpack.c.b16 %v876, %v875
        %893 = vmatpush.bf16.msra.mxu0 %v884
        %894 = vmatpush.bf16.msra.mxu0 %v883
        %895 = vmatpush.bf16.msra.mxu0 %v882
        %896 = vmatpush.bf16.msra.mxu0 %v881
        %897 = vmatpush.bf16.msra.mxu0 %v880
        %898 = vmatpush.bf16.msra.mxu0 %v879
        %899 = vmatpush.bf16.msra.mxu0 %v878
        %900 = vmatpush.bf16.msra.mxu0 %v877
        %901 = vmatmul.bf16.gmra.mxu0 %v826
        %v902 = vpop.f32.mrf.mxu0
        %v903 = vadd.f32 %v844, %v902
        %v904 = vpop.f32.mrf.mxu0
        %v905 = vadd.f32 %v844, %v904
        %906 = vmatmul.bf16.gmra.mxu0 %v827
        %v907 = vpop.f32.mrf.mxu0
        %v908 = vadd.f32 %v844, %v907
        %v909 = vpop.f32.mrf.mxu0
        %v910 = vadd.f32 %v844, %v909
        %911 = vdwg.mxu0
        %v912 = vpack.c.bf16 %v903, %v903
        %v913 = vpack.c.bf16 %v905, %v905
        %v914 = vpack.c.bf16 %v908, %v908
        %v915 = vpack.c.bf16 %v910, %v910
        %916 = vst [vmem:[%s396] sm:$0xf] %v912
        %917 = vst [vmem:[%s396 + $0x4] sm:$0xf] %v913
        %918 = vst [vmem:[%s396 + $0x8] sm:$0xf] %v914
        %919 = vst [vmem:[%s396 + $0xc] sm:$0xf] %v915
        %s920 = sand.u32 %s190, 1
        %s921 = scalar_lea.sflag [#allocation4], %s920
        %s922 = sand.u32 %s190, 1
        %s923 = smul.addr %s922, 16
        %s924 = scalar_lea.vmem [#allocation13], %s923
        // Predicated region
        $region69: #{tpu_custom_call.1} parent=43 // pred_check
          %p925 = pneg %p200
        $region70: #{tpu_custom_call.1} parent=43 // pred_check_branch
          %927 = sbr.rel (%p925) target = $region72
        $region71: #{tpu_custom_call.1} parent=43 // pred_region
          %s928 = smul.u32 4, %s33
          %930 = vsyncadd %s921, 0
          %s931 = smul.addr %s32, 8
          %s932 = sadd.s32 %s928, %s931
          %s933 = smul.addr %s932, 4
          %s934 = scalar_lea.hbm %s6, %s933
          %s935 = sshll.u32 %s924, 4
          %s936 = int_to_ptr.vmem [resolvable:$true] %s935
          %s937 = sshll.u32 %s934, 4
          %s938 = int_to_ptr.hbm [resolvable:$true] %s937
          %943 = dma.vmem_to_hbm [thread:$0]  %s936, 256, %s938, %s921, 64, 64, 4
        $region72: #{tpu_custom_call.1} parent=43 // pred_fallthru
          _
      $region44: #{tpu_custom_call.1} parent=5 // pred_fallthru
        _
      %p944 = scmp.le.s32.totalorder 2, %s23
      // Predicated region
      $region73: #{tpu_custom_call.1} parent=5 // pred_check
        %p945 = pneg %p944
      $region74: #{tpu_custom_call.1} parent=5 // pred_check_branch
        %947 = sbr.rel (%p945) target = $region76
      $region75: #{tpu_custom_call.1} parent=5 // pred_region
        %s948 = ssub.s32 %s23, 2
        // Predicated region
        $region77: #{tpu_custom_call.1} parent=75 // pred_check
          %p949 = pneg %p206
        $region78: #{tpu_custom_call.1} parent=75 // pred_check_branch
          %951 = sbr.rel (%p949) target = $region80
        $region79: #{tpu_custom_call.1} parent=75 // pred_region
          %s952 = sand.u32 %s191, 1
          %s953 = scalar_lea.sflag [#allocation4], %s952
          %s954 = sand.u32 %s191, 1
          %s955 = smul.addr %s954, 16
          %s956 = scalar_lea.vmem [#allocation13], %s955
          %958 = dma.done %s953, 256
        $region80: #{tpu_custom_call.1} parent=75 // pred_fallthru
          _
      $region76: #{tpu_custom_call.1} parent=5 // pred_fallthru
        _
    $region6: #{tpu_custom_call.1} parent=1 // loop_footer
      %s27 = sadd.s32 1, %s23
    $region7: #{tpu_custom_call.1} parent=1 // loop_footer_branch
      %22 = sbr.rel target = $region3
    $region8: #{tpu_custom_call.1} parent=1 // loop_exit
      _
    %959 = vsyncpa [#allocation3], 1
    %s960 = scalar_lea.sflag [#allocation3], 1
    %961 = vsyncpa %s960, 1
    %962 = vsyncpa [#allocation6], 1
    %s963 = scalar_lea.sflag [#allocation6], 1
    %964 = vsyncpa %s963, 1
    %965 = vsyncpa [#allocation9], 1
    %966 = vsyncpa [#allocation12], 1
    %967 = vsyncpa [#allocation4], 1
    %s968 = scalar_lea.sflag [#allocation4], 1
    %969 = vsyncpa %s968, 1

</llo_original>
